<compile_context>
chip_gen: v7x
topology: tpu7x:2x2x1
jax: 0.10.0
libtpu: 0.0.40
codegen_flags: <defaults>
</compile_context>

<pallas_src>
import jax
import jax.numpy as jnp
from jax.experimental import pallas as pl
from jax.experimental.pallas import tpu as pltpu

N_NODES = 12  # fixed by the module (attention is 12x12, .view([1, 12, 40]))


# ----------------------------------------------------------------------------
# Kernel: fused 4-layer GCN stack over a block of tb batch elements.
# Each layer is a single (tb, 12*f_in) @ (12*f_in, 12*f_out) matmul (kron-fused
# A_l and W_l), bias add, ReLU.  No reshapes / broadcasts inside the kernel.
# ----------------------------------------------------------------------------
def _gcn_stack_kernel(x_ref,
                      m1_ref, b1_ref, m2_ref, b2_ref,
                      m3_ref, b3_ref, m4_ref, b4_ref,
                      out_ref):
    """x_ref   : (tb, 12*nfeat)   flattened per-sample node features
       m*_ref  : (12*f_in, 12*f_out)   kron(A_l^T, W_l), VMEM resident
       b*_ref  : (1, 12*f_out)         bias tiled over the 12 nodes
       out_ref : (tb, 12*nclass)
    """
    def layer(h, m_ref, b_ref):
        y = jnp.dot(h, m_ref[...], preferred_element_type=jnp.float32)
        return jnp.maximum(y + b_ref[...], 0.0)

    h = x_ref[...]
    h = layer(h, m1_ref, b1_ref)
    h = layer(h, m2_ref, b2_ref)
    h = layer(h, m3_ref, b3_ref)
    out_ref[...] = layer(h, m4_ref, b4_ref).astype(out_ref.dtype)


def gcn_forward(x_input, adj, params, *, block_b=1024):
    """x_input: (B, 12, nfeat), adj: (12, 12)  ->  (B, 12, nclass)."""
    B, n, nfeat = x_input.shape
    assert n == N_NODES
    nclass = params["w4"].shape[1]

    # ---- batch-independent adjacency + fused per-layer operators (wrapper, tiny) ----
    #   adj_eff = adj + softmax(relu(nodevec1 @ nodevec2), axis=1)
    #   M_l     = kron((attention_l * adj_eff)^T, W_l)
    s = jnp.maximum(params["nodevec1"] @ params["nodevec2"], 0.0)
    adj_eff = adj + jax.nn.softmax(s, axis=1)

    fused_w, fused_b = [], []
    for l in (1, 2, 3, 4):
        a_l = params[f"a{l}"] * adj_eff                               # (12, 12)
        fused_w.append(jnp.kron(a_l.T, params[f"w{l}"]))              # (12*fin, 12*fout)
        fused_b.append(jnp.tile(params[f"b{l}"], (1, N_NODES)))       # (1, 12*fout)

    d_in = N_NODES * nfeat
    d_out = N_NODES * nclass

    # ---- batch blocking ----
    if B < 16:
        tb, nb = B, 1                              # single block (block dim == array dim)
    else:
        tb = min(block_b, pl.cdiv(B, 2))           # >=2 steps so v7x's 2 TCs can share work
        tb = ((tb + 7) // 8) * 8                   # sublane-aligned block rows
        nb = pl.cdiv(B, tb)
        tb = ((pl.cdiv(B, nb) + 7) // 8) * 8       # rebalance to minimize padded tail
        nb = pl.cdiv(B, tb)
    b_pad = nb * tb

    x_rows = x_input.reshape(B, d_in)              # free row-major flatten in HBM
    if b_pad != B:
        x_rows = jnp.pad(x_rows, ((0, b_pad - B), (0, 0)))

    in_specs = [pl.BlockSpec((tb, d_in), lambda i: (i, 0))]
    operands = [x_rows]
    for w, b in zip(fused_w, fused_b):
        in_specs.append(pl.BlockSpec(w.shape, lambda i: (0, 0)))      # VMEM resident
        in_specs.append(pl.BlockSpec(b.shape, lambda i: (0, 0)))      # VMEM resident
        operands.extend([w, b])

    out_rows = pl.pallas_call(
        _gcn_stack_kernel,
        out_shape=jax.ShapeDtypeStruct((b_pad, d_out), jnp.float32),
        grid=(nb,),
        in_specs=in_specs,
        out_specs=pl.BlockSpec((tb, d_out), lambda i: (i, 0)),
        compiler_params=pltpu.CompilerParams(
            dimension_semantics=("parallel",)),
    )(*operands)

    return out_rows[:B].reshape(B, N_NODES, nclass)


# ----------------------------------------------------------------------------
# Deterministic parameter initialization (mirrors the module's __init__ shapes)
# ----------------------------------------------------------------------------
def _xavier_uniform(key, shape):
    fan_in, fan_out = shape
    bound = (6.0 / (fan_in + fan_out)) ** 0.5
    return jax.random.uniform(key, shape, jnp.float32, -bound, bound)


def init_params(key, nfeat, nhid1, nhid2, nhid3, nclass):
    ks = jax.random.split(key, 10)
    dims = [(nfeat, nhid1), (nhid1, nhid2), (nhid2, nhid3), (nhid3, nclass)]
    params = {
        "nodevec1": jax.random.normal(ks[0], (N_NODES, 10), jnp.float32),
        "nodevec2": jax.random.normal(ks[1], (10, N_NODES), jnp.float32),
    }
    for li, (din, dout) in enumerate(dims, start=1):
        params[f"w{li}"] = _xavier_uniform(ks[2 * li], (din, dout))
        params[f"a{li}"] = _xavier_uniform(ks[2 * li + 1], (N_NODES, N_NODES))
        params[f"b{li}"] = jnp.zeros((1, dout), jnp.float32)  # use_bias=True -> zeros
    return params


# Pure-JAX reference (mirrors the torch forward) for a sanity check
def gcn_reference(x_input, adj, params):
    s = jnp.maximum(params["nodevec1"] @ params["nodevec2"], 0.0)
    adp = jax.nn.softmax(s, axis=1)
    adj_eff = adj + adp

    def layer(h, a, w, b):                      # h: (B, 12, f_in)
        support = jnp.einsum("bni,io->bno", h, w)
        out = jnp.einsum("nk,bko->bno", a * adj_eff, support) + b
        return jnp.maximum(out, 0.0)

    h = x_input
    h = layer(h, params["a1"], params["w1"], params["b1"])
    h = layer(h, params["a2"], params["w2"], params["b2"])
    h = layer(h, params["a3"], params["w3"], params["b3"])
    h = layer(h, params["a4"], params["w4"], params["b4"])
    return h


if __name__ == "__main__":
    B, nfeat, nhid1, nhid2, nhid3, nclass = 2, 16, 32, 32, 32, 40

    key = jax.random.PRNGKey(0)
    k_x, k_adj, k_p = jax.random.split(key, 3)
    x = jax.random.normal(k_x, (B, N_NODES, nfeat), jnp.float32)
    adj = jax.random.uniform(k_adj, (N_NODES, N_NODES), jnp.float32)
    params = init_params(k_p, nfeat, nhid1, nhid2, nhid3, nclass)

    out = gcn_forward(x, adj, params)
    out = jax.block_until_ready(out)

    ref = gcn_reference(x, adj, params)
    assert out.shape == (B, N_NODES, nclass), out.shape
    assert jnp.allclose(out, ref, atol=1e-3, rtol=1e-3), "mismatch vs reference"

    print("KERNEL_OK")
</pallas_src>

<mosaic_0001>
module attributes {stable_mosaic.version = 11 : i64} {
  func.func @_gcn_stack_kernel(%arg0: i32, %arg1: memref<2x192xf32, #tpu.memory_space<vmem>>, %arg2: memref<192x384xf32, #tpu.memory_space<vmem>>, %arg3: memref<1x384xf32, #tpu.memory_space<vmem>>, %arg4: memref<384x384xf32, #tpu.memory_space<vmem>>, %arg5: memref<1x384xf32, #tpu.memory_space<vmem>>, %arg6: memref<384x384xf32, #tpu.memory_space<vmem>>, %arg7: memref<1x384xf32, #tpu.memory_space<vmem>>, %arg8: memref<384x480xf32, #tpu.memory_space<vmem>>, %arg9: memref<1x480xf32, #tpu.memory_space<vmem>>, %arg10: memref<2x480xf32, #tpu.memory_space<vmem>>) attributes {dimension_semantics = [#tpu.dimension_semantics<parallel>], iteration_bounds = array<i64: 1>, scalar_prefetch = 0 : i64, scratch_operands = 0 : i64, tpu.core_type = #tpu.core_type<tc>, window_params = [{transform_indices = @transform_0, window_bounds = array<i64: 2, 192>}, {pipeline_mode = #tpu.pipeline_mode<synchronous>, transform_indices = @transform_1, window_bounds = array<i64: 192, 384>}, {pipeline_mode = #tpu.pipeline_mode<synchronous>, transform_indices = @transform_2, window_bounds = array<i64: 1, 384>}, {pipeline_mode = #tpu.pipeline_mode<synchronous>, transform_indices = @transform_3, window_bounds = array<i64: 384, 384>}, {pipeline_mode = #tpu.pipeline_mode<synchronous>, transform_indices = @transform_4, window_bounds = array<i64: 1, 384>}, {pipeline_mode = #tpu.pipeline_mode<synchronous>, transform_indices = @transform_5, window_bounds = array<i64: 384, 384>}, {pipeline_mode = #tpu.pipeline_mode<synchronous>, transform_indices = @transform_6, window_bounds = array<i64: 1, 384>}, {pipeline_mode = #tpu.pipeline_mode<synchronous>, transform_indices = @transform_7, window_bounds = array<i64: 384, 480>}, {pipeline_mode = #tpu.pipeline_mode<synchronous>, transform_indices = @transform_8, window_bounds = array<i64: 1, 480>}, {transform_indices = @transform_9, window_bounds = array<i64: 2, 480>}]} {
    %c0 = arith.constant 0 : index
    %c0_0 = arith.constant 0 : index
    %0 = vector.load %arg1[%c0, %c0_0] : memref<2x192xf32, #tpu.memory_space<vmem>>, vector<2x192xf32>
    %c0_1 = arith.constant 0 : index
    %c0_2 = arith.constant 0 : index
    %1 = vector.load %arg2[%c0_1, %c0_2] : memref<192x384xf32, #tpu.memory_space<vmem>>, vector<192x384xf32>
    %cst = arith.constant dense<0.000000e+00> : vector<2x384xf32>
    %2 = tpu.matmul %0, %1, %cst {dimension_numbers = #tpu.dot_dimension_numbers<[1], [0], [0], [1], [0, 0, 1, 1], [], []>} : vector<2x192xf32>, vector<192x384xf32>, vector<2x384xf32> -> vector<2x384xf32>
    %c0_3 = arith.constant 0 : index
    %c0_4 = arith.constant 0 : index
    %3 = vector.load %arg3[%c0_3, %c0_4] : memref<1x384xf32, #tpu.memory_space<vmem>>, vector<1x384xf32>
    %4 = vector.broadcast %3 : vector<1x384xf32> to vector<2x384xf32>
    %5 = arith.addf %2, %4 : vector<2x384xf32>
    %cst_5 = arith.constant 0.000000e+00 : f32
    %6 = vector.broadcast %cst_5 : f32 to vector<2x384xf32>
    %7 = arith.maximumf %5, %6 : vector<2x384xf32>
    %c0_6 = arith.constant 0 : index
    %c0_7 = arith.constant 0 : index
    %8 = vector.load %arg4[%c0_6, %c0_7] : memref<384x384xf32, #tpu.memory_space<vmem>>, vector<384x384xf32>
    %cst_8 = arith.constant dense<0.000000e+00> : vector<2x384xf32>
    %9 = tpu.matmul %7, %8, %cst_8 {dimension_numbers = #tpu.dot_dimension_numbers<[1], [0], [0], [1], [0, 0, 1, 1], [], []>} : vector<2x384xf32>, vector<384x384xf32>, vector<2x384xf32> -> vector<2x384xf32>
    %c0_9 = arith.constant 0 : index
    %c0_10 = arith.constant 0 : index
    %10 = vector.load %arg5[%c0_9, %c0_10] : memref<1x384xf32, #tpu.memory_space<vmem>>, vector<1x384xf32>
    %11 = vector.broadcast %10 : vector<1x384xf32> to vector<2x384xf32>
    %12 = arith.addf %9, %11 : vector<2x384xf32>
    %cst_11 = arith.constant 0.000000e+00 : f32
    %13 = vector.broadcast %cst_11 : f32 to vector<2x384xf32>
    %14 = arith.maximumf %12, %13 : vector<2x384xf32>
    %c0_12 = arith.constant 0 : index
    %c0_13 = arith.constant 0 : index
    %15 = vector.load %arg6[%c0_12, %c0_13] : memref<384x384xf32, #tpu.memory_space<vmem>>, vector<384x384xf32>
    %cst_14 = arith.constant dense<0.000000e+00> : vector<2x384xf32>
    %16 = tpu.matmul %14, %15, %cst_14 {dimension_numbers = #tpu.dot_dimension_numbers<[1], [0], [0], [1], [0, 0, 1, 1], [], []>} : vector<2x384xf32>, vector<384x384xf32>, vector<2x384xf32> -> vector<2x384xf32>
    %c0_15 = arith.constant 0 : index
    %c0_16 = arith.constant 0 : index
    %17 = vector.load %arg7[%c0_15, %c0_16] : memref<1x384xf32, #tpu.memory_space<vmem>>, vector<1x384xf32>
    %18 = vector.broadcast %17 : vector<1x384xf32> to vector<2x384xf32>
    %19 = arith.addf %16, %18 : vector<2x384xf32>
    %cst_17 = arith.constant 0.000000e+00 : f32
    %20 = vector.broadcast %cst_17 : f32 to vector<2x384xf32>
    %21 = arith.maximumf %19, %20 : vector<2x384xf32>
    %c0_18 = arith.constant 0 : index
    %c0_19 = arith.constant 0 : index
    %22 = vector.load %arg8[%c0_18, %c0_19] : memref<384x480xf32, #tpu.memory_space<vmem>>, vector<384x480xf32>
    %cst_20 = arith.constant dense<0.000000e+00> : vector<2x480xf32>
    %23 = tpu.matmul %21, %22, %cst_20 {dimension_numbers = #tpu.dot_dimension_numbers<[1], [0], [0], [1], [0, 0, 1, 1], [], []>} : vector<2x384xf32>, vector<384x480xf32>, vector<2x480xf32> -> vector<2x480xf32>
    %c0_21 = arith.constant 0 : index
    %c0_22 = arith.constant 0 : index
    %24 = vector.load %arg9[%c0_21, %c0_22] : memref<1x480xf32, #tpu.memory_space<vmem>>, vector<1x480xf32>
    %25 = vector.broadcast %24 : vector<1x480xf32> to vector<2x480xf32>
    %26 = arith.addf %23, %25 : vector<2x480xf32>
    %cst_23 = arith.constant 0.000000e+00 : f32
    %27 = vector.broadcast %cst_23 : f32 to vector<2x480xf32>
    %28 = arith.maximumf %26, %27 : vector<2x480xf32>
    %c0_24 = arith.constant 0 : index
    %c0_25 = arith.constant 0 : index
    %29 = vector.load %arg10[%c0_24, %c0_25] : memref<2x480xf32, #tpu.memory_space<vmem>>, vector<2x480xf32>
    tpu.vector_store %arg10[%c0_24, %c0_25], %28 {strides = array<i32>} : memref<2x480xf32, #tpu.memory_space<vmem>>, vector<2x480xf32>,
    return
  }
  func.func @transform_0(%arg0: i32) -> (i32, i32) {
    %c0_i32 = arith.constant 0 : i32
    %c0_i32_0 = arith.constant 0 : i32
    return %arg0, %c0_i32 : i32, i32
  }
  func.func @transform_1(%arg0: i32) -> (i32, i32) {
    %c0_i32 = arith.constant 0 : i32
    %c0_i32_0 = arith.constant 0 : i32
    %c0_i32_1 = arith.constant 0 : i32
    return %c0_i32, %c0_i32_0 : i32, i32
  }
  func.func @transform_2(%arg0: i32) -> (i32, i32) {
    %c0_i32 = arith.constant 0 : i32
    %c0_i32_0 = arith.constant 0 : i32
    %c0_i32_1 = arith.constant 0 : i32
    return %c0_i32, %c0_i32_0 : i32, i32
  }
  func.func @transform_3(%arg0: i32) -> (i32, i32) {
    %c0_i32 = arith.constant 0 : i32
    %c0_i32_0 = arith.constant 0 : i32
    %c0_i32_1 = arith.constant 0 : i32
    return %c0_i32, %c0_i32_0 : i32, i32
  }
  func.func @transform_4(%arg0: i32) -> (i32, i32) {
    %c0_i32 = arith.constant 0 : i32
    %c0_i32_0 = arith.constant 0 : i32
    %c0_i32_1 = arith.constant 0 : i32
    return %c0_i32, %c0_i32_0 : i32, i32
  }
  func.func @transform_5(%arg0: i32) -> (i32, i32) {
    %c0_i32 = arith.constant 0 : i32
    %c0_i32_0 = arith.constant 0 : i32
    %c0_i32_1 = arith.constant 0 : i32
    return %c0_i32, %c0_i32_0 : i32, i32
  }
  func.func @transform_6(%arg0: i32) -> (i32, i32) {
    %c0_i32 = arith.constant 0 : i32
    %c0_i32_0 = arith.constant 0 : i32
    %c0_i32_1 = arith.constant 0 : i32
    return %c0_i32, %c0_i32_0 : i32, i32
  }
  func.func @transform_7(%arg0: i32) -> (i32, i32) {
    %c0_i32 = arith.constant 0 : i32
    %c0_i32_0 = arith.constant 0 : i32
    %c0_i32_1 = arith.constant 0 : i32
    return %c0_i32, %c0_i32_0 : i32, i32
  }
  func.func @transform_8(%arg0: i32) -> (i32, i32) {
    %c0_i32 = arith.constant 0 : i32
    %c0_i32_0 = arith.constant 0 : i32
    %c0_i32_1 = arith.constant 0 : i32
    return %c0_i32, %c0_i32_0 : i32, i32
  }
  func.func @transform_9(%arg0: i32) -> (i32, i32) {
    %c0_i32 = arith.constant 0 : i32
    %c0_i32_0 = arith.constant 0 : i32
    return %arg0, %c0_i32 : i32, i32
  }
}

</mosaic_0001>

<llo_original>
// kernel: tpu_custom_call.1
$region0: #{tpu_custom_call.1}
  #allocation0 [shape = 'u32[]', space=smem, size = 0x4, offset = 0x4, fixed_abs, tag = 'smem constant byte address 0x4 - core index']
  #allocation1 [shape = 'u32[144,128]{1,0:T(1,128)}', space=vmem, size = 0x12000, scoped, tag = 'internal scratch']
  %s0 = inlined_call_operand.vmem [shape: f32[2,192], index: 0, kind: input, shape index: {}]
  %s1 = inlined_call_operand.vmem [shape: f32[192,384], index: 1, kind: input, shape index: {}]
  %s2 = inlined_call_operand.vmem [shape: f32[1,384], index: 2, kind: input, shape index: {}]
  %s3 = inlined_call_operand.vmem [shape: f32[384,384], index: 3, kind: input, shape index: {}]
  %s4 = inlined_call_operand.vmem [shape: f32[1,384], index: 4, kind: input, shape index: {}]
  %s5 = inlined_call_operand.vmem [shape: f32[384,384], index: 5, kind: input, shape index: {}]
  %s6 = inlined_call_operand.vmem [shape: f32[1,384], index: 6, kind: input, shape index: {}]
  %s7 = inlined_call_operand.vmem [shape: f32[384,480], index: 7, kind: input, shape index: {}]
  %s8 = inlined_call_operand.vmem [shape: f32[1,480], index: 8, kind: input, shape index: {}]
  %s9 = inlined_call_operand.hbm [shape: f32[2,480], index: 9, kind: output, shape index: {}]
  %s10 = sld [smem:[#allocation0]]
  $region46: #{tpu_custom_call.1} parent=0
    _
  %s12 = ssub.s32 1, %s10
  %s13 = scalar_select 0, %s12, %s10
  $region1: #{tpu_custom_call.1} parent=0
    #allocation2 [shape = 'u8[4096]{0}', space=vmem, size = 0x1000, scoped, tag = 'output window, operand 0, single buffered']
    #allocation3 [shape = 's32[1]{0}', space=sflag, size = 0x4, scoped, tag = 'scoped memory for tpu_custom_call.1']
    %14 = vsyncpa [#allocation3], 0
    // Predicated region
    $region2: #{tpu_custom_call.1} parent=1 // pred_check
      _
    $region3: #{tpu_custom_call.1} parent=1 // pred_check_branch
      %16 = sbr.rel (0) target = $region5
    $region4: #{tpu_custom_call.1} parent=1 // pred_region
      _
    $region5: #{tpu_custom_call.1} parent=1 // pred_fallthru
      _
    // Predicated region
    $region6: #{tpu_custom_call.1} parent=1 // pred_check
      _
    $region7: #{tpu_custom_call.1} parent=1 // pred_check_branch
      %18 = sbr.rel (0) target = $region9
    $region8: #{tpu_custom_call.1} parent=1 // pred_region
      _
    $region9: #{tpu_custom_call.1} parent=1 // pred_fallthru
      _
    // Predicated region
    $region10: #{tpu_custom_call.1} parent=1 // pred_check
      _
    $region11: #{tpu_custom_call.1} parent=1 // pred_check_branch
      %20 = sbr.rel (0) target = $region13
    $region12: #{tpu_custom_call.1} parent=1 // pred_region
      _
    $region13: #{tpu_custom_call.1} parent=1 // pred_fallthru
      _
    // Predicated region
    $region14: #{tpu_custom_call.1} parent=1 // pred_check
      _
    $region15: #{tpu_custom_call.1} parent=1 // pred_check_branch
      %22 = sbr.rel (0) target = $region17
    $region16: #{tpu_custom_call.1} parent=1 // pred_region
      _
    $region17: #{tpu_custom_call.1} parent=1 // pred_fallthru
      _
    // Predicated region
    $region18: #{tpu_custom_call.1} parent=1 // pred_check
      _
    $region19: #{tpu_custom_call.1} parent=1 // pred_check_branch
      %24 = sbr.rel (0) target = $region21
    $region20: #{tpu_custom_call.1} parent=1 // pred_region
      _
    $region21: #{tpu_custom_call.1} parent=1 // pred_fallthru
      _
    // Predicated region
    $region22: #{tpu_custom_call.1} parent=1 // pred_check
      _
    $region23: #{tpu_custom_call.1} parent=1 // pred_check_branch
      %26 = sbr.rel (0) target = $region25
    $region24: #{tpu_custom_call.1} parent=1 // pred_region
      _
    $region25: #{tpu_custom_call.1} parent=1 // pred_fallthru
      _
    // Predicated region
    $region26: #{tpu_custom_call.1} parent=1 // pred_check
      _
    $region27: #{tpu_custom_call.1} parent=1 // pred_check_branch
      %28 = sbr.rel (0) target = $region29
    $region28: #{tpu_custom_call.1} parent=1 // pred_region
      _
    $region29: #{tpu_custom_call.1} parent=1 // pred_fallthru
      _
    // Predicated region
    $region30: #{tpu_custom_call.1} parent=1 // pred_check
      _
    $region31: #{tpu_custom_call.1} parent=1 // pred_check_branch
      %30 = sbr.rel (0) target = $region33
    $region32: #{tpu_custom_call.1} parent=1 // pred_region
      _
    $region33: #{tpu_custom_call.1} parent=1 // pred_fallthru
      _
    // Predicated region
    $region34: #{tpu_custom_call.1} parent=1 // pred_check
      _
    $region35: #{tpu_custom_call.1} parent=1 // pred_check_branch
      %32 = sbr.rel (0) target = $region37
    $region36: #{tpu_custom_call.1} parent=1 // pred_region
      _
    $region37: #{tpu_custom_call.1} parent=1 // pred_fallthru
      _
    %v33 = vld [vmem:[%s0] sm:$0xf]
    %v34 = vld [vmem:[%s1] sm:$0xff]
    %v35 = vld [vmem:[%s1 + $0x8] sm:$0xff]
    %v36 = vld [vmem:[%s1 + $0x10] sm:$0xff]
    %v37 = vld [vmem:[%s1 + $0x18] sm:$0xff]
    %v38 = vld [vmem:[%s1 + $0x20] sm:$0xff]
    %v39 = vld [vmem:[%s1 + $0x28] sm:$0xff]
    %v40 = vld [vmem:[%s1 + $0x30] sm:$0xff]
    %v41 = vld [vmem:[%s1 + $0x38] sm:$0xff]
    %v42 = vld [vmem:[%s1 + $0x40] sm:$0xff]
    %v43 = vld [vmem:[%s1 + $0x48] sm:$0xff]
    %v44 = vld [vmem:[%s1 + $0x50] sm:$0xff]
    %v45 = vld [vmem:[%s1 + $0x58] sm:$0xff]
    %v46 = vld [vmem:[%s1 + $0x60] sm:$0xff]
    %v47 = vld [vmem:[%s1 + $0x68] sm:$0xff]
    %v48 = vld [vmem:[%s1 + $0x70] sm:$0xff]
    %v49 = vld [vmem:[%s1 + $0x78] sm:$0xff]
    %v50 = vld [vmem:[%s1 + $0x80] sm:$0xff]
    %v51 = vld [vmem:[%s1 + $0x88] sm:$0xff]
    %v52 = vld [vmem:[%s1 + $0x90] sm:$0xff]
    %v53 = vld [vmem:[%s1 + $0x98] sm:$0xff]
    %v54 = vld [vmem:[%s1 + $0xa0] sm:$0xff]
    %v55 = vld [vmem:[%s1 + $0xa8] sm:$0xff]
    %v56 = vld [vmem:[%s1 + $0xb0] sm:$0xff]
    %v57 = vld [vmem:[%s1 + $0xb8] sm:$0xff]
    %v58 = vld [vmem:[%s1 + $0xc0] sm:$0xff]
    %v59 = vld [vmem:[%s1 + $0xc8] sm:$0xff]
    %v60 = vld [vmem:[%s1 + $0xd0] sm:$0xff]
    %v61 = vld [vmem:[%s1 + $0xd8] sm:$0xff]
    %v62 = vld [vmem:[%s1 + $0xe0] sm:$0xff]
    %v63 = vld [vmem:[%s1 + $0xe8] sm:$0xff]
    %v64 = vld [vmem:[%s1 + $0xf0] sm:$0xff]
    %v65 = vld [vmem:[%s1 + $0xf8] sm:$0xff]
    %v66 = vld [vmem:[%s1 + $0x100] sm:$0xff]
    %v67 = vld [vmem:[%s1 + $0x108] sm:$0xff]
    %v68 = vld [vmem:[%s1 + $0x110] sm:$0xff]
    %v69 = vld [vmem:[%s1 + $0x118] sm:$0xff]
    %v70 = vld [vmem:[%s1 + $0x120] sm:$0xff]
    %v71 = vld [vmem:[%s1 + $0x128] sm:$0xff]
    %v72 = vld [vmem:[%s1 + $0x130] sm:$0xff]
    %v73 = vld [vmem:[%s1 + $0x138] sm:$0xff]
    %v74 = vld [vmem:[%s1 + $0x140] sm:$0xff]
    %v75 = vld [vmem:[%s1 + $0x148] sm:$0xff]
    %v76 = vld [vmem:[%s1 + $0x150] sm:$0xff]
    %v77 = vld [vmem:[%s1 + $0x158] sm:$0xff]
    %v78 = vld [vmem:[%s1 + $0x160] sm:$0xff]
    %v79 = vld [vmem:[%s1 + $0x168] sm:$0xff]
    %v80 = vld [vmem:[%s1 + $0x170] sm:$0xff]
    %v81 = vld [vmem:[%s1 + $0x178] sm:$0xff]
    %v82 = vld [vmem:[%s1 + $0x180] sm:$0xff]
    %v83 = vld [vmem:[%s1 + $0x188] sm:$0xff]
    %v84 = vld [vmem:[%s1 + $0x190] sm:$0xff]
    %v85 = vld [vmem:[%s1 + $0x198] sm:$0xff]
    %v86 = vld [vmem:[%s1 + $0x1a0] sm:$0xff]
    %v87 = vld [vmem:[%s1 + $0x1a8] sm:$0xff]
    %v88 = vld [vmem:[%s1 + $0x1b0] sm:$0xff]
    %v89 = vld [vmem:[%s1 + $0x1b8] sm:$0xff]
    %v90 = vld [vmem:[%s1 + $0x1c0] sm:$0xff]
    %v91 = vld [vmem:[%s1 + $0x1c8] sm:$0xff]
    %v92 = vld [vmem:[%s1 + $0x1d0] sm:$0xff]
    %v93 = vld [vmem:[%s1 + $0x1d8] sm:$0xff]
    %v94 = vld [vmem:[%s1 + $0x1e0] sm:$0xff]
    %v95 = vld [vmem:[%s1 + $0x1e8] sm:$0xff]
    %v96 = vld [vmem:[%s1 + $0x1f0] sm:$0xff]
    %v97 = vld [vmem:[%s1 + $0x1f8] sm:$0xff]
    %v98 = vld [vmem:[%s1 + $0x200] sm:$0xff]
    %v99 = vld [vmem:[%s1 + $0x208] sm:$0xff]
    %v100 = vld [vmem:[%s1 + $0x210] sm:$0xff]
    %v101 = vld [vmem:[%s1 + $0x218] sm:$0xff]
    %v102 = vld [vmem:[%s1 + $0x220] sm:$0xff]
    %v103 = vld [vmem:[%s1 + $0x228] sm:$0xff]
    %v104 = vld [vmem:[%s1 + $0x230] sm:$0xff]
    %v105 = vld [vmem:[%s1 + $0x238] sm:$0xff]
    %v106 = vld [vmem:[%s2] sm:$0x7]
    %v108 = vlaneseq
    %v109 = vshrl.u32 %v108, 7
    %v110 = vsub.s32 0, %v109
    %v111 = vrot.slane %v106, %v110
    %v112 = vlaneseq
    %v113 = vshrl.u32 %v112, 7
    %v114 = vsub.s32 1, %v113
    %v115 = vrot.slane %v106, %v114
    %v116 = vlaneseq
    %v117 = vshrl.u32 %v116, 7
    %v118 = vsub.s32 2, %v117
    %v119 = vrot.slane %v106, %v118
    %v125 = vunpack.c.l.s4 1983009808
    %v126 = vunpack.c.0.s8 %v125
    %v127 = vlaneseq
    %v128 = vshrl.u32 %v127, 7
    %v129 = vsub.s32 %v126, %v128
    %v130 = vrot.slane %v33, %v129
    %v131 = vcombine.high %v130, %v130
    %vm133 = vcmask 523264
    %v134 = vsel %vm133, %v131, 0
    %136 = vmatprep.subr.mxu0 %v35
    %137 = vmatpush1.msra.mxu0 %v34
    %138 = vmatprep.subr.mxu0 %v38
    %139 = vmatpush1.msra.mxu0 %v37
    %140 = vmatprep.subr.mxu0 %v41
    %141 = vmatpush1.msra.mxu0 %v40
    %142 = vmatprep.subr.mxu0 %v44
    %143 = vmatpush1.msra.mxu0 %v43
    %144 = vmatprep.subr.mxu0 %v47
    %145 = vmatpush1.msra.mxu0 %v46
    %146 = vmatprep.subr.mxu0 %v50
    %147 = vmatpush1.msra.mxu0 %v49
    %148 = vmatprep.subr.mxu0 %v53
    %149 = vmatpush1.msra.mxu0 %v52
    %150 = vmatprep.subr.mxu0 %v56
    %151 = vmatpush1.msra.mxu0 %v55
    %152 = vmatprep.subr.mxu0 %v59
    %153 = vmatpush1.msra.mxu0 %v58
    %154 = vmatprep.subr.mxu0 %v62
    %155 = vmatpush1.msra.mxu0 %v61
    %156 = vmatprep.subr.mxu0 %v65
    %157 = vmatpush1.msra.mxu0 %v64
    %158 = vmatprep.subr.mxu0 %v68
    %159 = vmatpush1.msra.mxu0 %v67
    %160 = vmatprep.subr.mxu0 %v71
    %161 = vmatpush1.msra.mxu0 %v70
    %162 = vmatprep.subr.mxu0 %v74
    %163 = vmatpush1.msra.mxu0 %v73
    %164 = vmatprep.subr.mxu0 %v77
    %165 = vmatpush1.msra.mxu0 %v76
    %166 = vmatprep.subr.mxu0 %v80
    %167 = vmatpush1.msra.mxu0 %v79
    %168 = vmatprep.subr.mxu0 %v83
    %169 = vmatpush1.msra.mxu0 %v82
    %170 = vmatprep.subr.mxu0 %v86
    %171 = vmatpush1.msra.mxu0 %v85
    %172 = vmatprep.subr.mxu0 %v89
    %173 = vmatpush1.msra.mxu0 %v88
    %174 = vmatprep.subr.mxu0 %v92
    %175 = vmatpush1.msra.mxu0 %v91
    %176 = vmatprep.subr.mxu0 %v95
    %177 = vmatpush1.msra.mxu0 %v94
    %178 = vmatprep.subr.mxu0 %v98
    %179 = vmatpush1.msra.mxu0 %v97
    %180 = vmatprep.subr.mxu0 %v101
    %181 = vmatpush1.msra.mxu0 %v100
    %182 = vmatprep.subr.mxu0 %v104
    %183 = vmatpush1.msra.mxu0 %v103
    %184 = vmatprep.subr.mxu0 0.0
    %185 = vmatpush1.msra.mxu0 0.0
    %186 = vmatprep.subr.mxu0 0.0
    %187 = vmatpush1.msra.mxu0 0.0
    %188 = vmatprep.subr.mxu0 0.0
    %189 = vmatpush1.msra.mxu0 0.0
    %190 = vmatprep.subr.mxu0 0.0
    %191 = vmatpush1.msra.mxu0 0.0
    %192 = vmatprep.subr.mxu0 0.0
    %193 = vmatpush1.msra.mxu0 0.0
    %194 = vmatprep.subr.mxu0 0.0
    %195 = vmatpush1.msra.mxu0 0.0
    %196 = vmatprep.subr.mxu0 0.0
    %197 = vmatpush1.msra.mxu0 0.0
    %198 = vmatprep.subr.mxu0 0.0
    %199 = vmatpush1.msra.mxu0 0.0
    %200 = vmatprep.mubr.f32.mxu0 %v134
    %201 = vmatmul.mubr.f32.gmra.mrb[0].mxu0 %v130
    %v202 = vpop.f32.mrb[0].mxu0
    %v203 = vadd.f32 %v111, %v202
    %v204 = vpop.f32.mrb[0].mxu0
    %v205 = vadd.f32 %v115, %v204
    %206 = vdwg.mxu0
    %207 = vmatprep.subr.mxu0 0.0
    %208 = vmatpush1.msra.mxu0 %v36
    %209 = vmatprep.subr.mxu0 0.0
    %210 = vmatpush1.msra.mxu0 %v39
    %211 = vmatprep.subr.mxu0 0.0
    %212 = vmatpush1.msra.mxu0 %v42
    %213 = vmatprep.subr.mxu0 0.0
    %214 = vmatpush1.msra.mxu0 %v45
    %215 = vmatprep.subr.mxu0 0.0
    %216 = vmatpush1.msra.mxu0 %v48
    %217 = vmatprep.subr.mxu0 0.0
    %218 = vmatpush1.msra.mxu0 %v51
    %219 = vmatprep.subr.mxu0 0.0
    %220 = vmatpush1.msra.mxu0 %v54
    %221 = vmatprep.subr.mxu0 0.0
    %222 = vmatpush1.msra.mxu0 %v57
    %223 = vmatprep.subr.mxu0 0.0
    %224 = vmatpush1.msra.mxu0 %v60
    %225 = vmatprep.subr.mxu0 0.0
    %226 = vmatpush1.msra.mxu0 %v63
    %227 = vmatprep.subr.mxu0 0.0
    %228 = vmatpush1.msra.mxu0 %v66
    %229 = vmatprep.subr.mxu0 0.0
    %230 = vmatpush1.msra.mxu0 %v69
    %231 = vmatprep.subr.mxu0 0.0
    %232 = vmatpush1.msra.mxu0 %v72
    %233 = vmatprep.subr.mxu0 0.0
    %234 = vmatpush1.msra.mxu0 %v75
    %235 = vmatprep.subr.mxu0 0.0
    %236 = vmatpush1.msra.mxu0 %v78
    %237 = vmatprep.subr.mxu0 0.0
    %238 = vmatpush1.msra.mxu0 %v81
    %239 = vmatprep.subr.mxu0 0.0
    %240 = vmatpush1.msra.mxu0 %v84
    %241 = vmatprep.subr.mxu0 0.0
    %242 = vmatpush1.msra.mxu0 %v87
    %243 = vmatprep.subr.mxu0 0.0
    %244 = vmatpush1.msra.mxu0 %v90
    %245 = vmatprep.subr.mxu0 0.0
    %246 = vmatpush1.msra.mxu0 %v93
    %247 = vmatprep.subr.mxu0 0.0
    %248 = vmatpush1.msra.mxu0 %v96
    %249 = vmatprep.subr.mxu0 0.0
    %250 = vmatpush1.msra.mxu0 %v99
    %251 = vmatprep.subr.mxu0 0.0
    %252 = vmatpush1.msra.mxu0 %v102
    %253 = vmatprep.subr.mxu0 0.0
    %254 = vmatpush1.msra.mxu0 %v105
    %255 = vmatprep.subr.mxu0 0.0
    %256 = vmatpush1.msra.mxu0 0.0
    %257 = vmatprep.subr.mxu0 0.0
    %258 = vmatpush1.msra.mxu0 0.0
    %259 = vmatprep.subr.mxu0 0.0
    %260 = vmatpush1.msra.mxu0 0.0
    %261 = vmatprep.subr.mxu0 0.0
    %262 = vmatpush1.msra.mxu0 0.0
    %263 = vmatprep.subr.mxu0 0.0
    %264 = vmatpush1.msra.mxu0 0.0
    %265 = vmatprep.subr.mxu0 0.0
    %266 = vmatpush1.msra.mxu0 0.0
    %267 = vmatprep.subr.mxu0 0.0
    %268 = vmatpush1.msra.mxu0 0.0
    %269 = vmatprep.subr.mxu0 0.0
    %270 = vmatpush1.msra.mxu0 0.0
    %271 = vmatprep.mubr.f32.mxu0 %v134
    %272 = vmatmul.mubr.f32.gmra.mrb[0].mxu0 %v130
    %v273 = vpop.f32.mrb[0].mxu0
    %v274 = vadd.f32 %v119, %v273
    %v275 = vpop.f32.mrb[0].mxu0
    %276 = vdwg.mxu0
    %v277 = vmax.f32 %v203, 0.0
    %v278 = vmax.f32 %v205, 0.0
    %v279 = vmax.f32 %v274, 0.0
    %v280 = vld [vmem:[%s3] sm:$0xff]
    %v281 = vld [vmem:[%s3 + $0x8] sm:$0xff]
    %v282 = vld [vmem:[%s3 + $0x10] sm:$0xff]
    %v283 = vld [vmem:[%s3 + $0x18] sm:$0xff]
    %v284 = vld [vmem:[%s3 + $0x20] sm:$0xff]
    %v285 = vld [vmem:[%s3 + $0x28] sm:$0xff]
    %v286 = vld [vmem:[%s3 + $0x30] sm:$0xff]
    %v287 = vld [vmem:[%s3 + $0x38] sm:$0xff]
    %v288 = vld [vmem:[%s3 + $0x40] sm:$0xff]
    %v289 = vld [vmem:[%s3 + $0x48] sm:$0xff]
    %v290 = vld [vmem:[%s3 + $0x50] sm:$0xff]
    %v291 = vld [vmem:[%s3 + $0x58] sm:$0xff]
    %v292 = vld [vmem:[%s3 + $0x60] sm:$0xff]
    %v293 = vld [vmem:[%s3 + $0x68] sm:$0xff]
    %v294 = vld [vmem:[%s3 + $0x70] sm:$0xff]
    %v295 = vld [vmem:[%s3 + $0x78] sm:$0xff]
    %v296 = vld [vmem:[%s3 + $0x80] sm:$0xff]
    %v297 = vld [vmem:[%s3 + $0x88] sm:$0xff]
    %v298 = vld [vmem:[%s3 + $0x90] sm:$0xff]
    %v299 = vld [vmem:[%s3 + $0x98] sm:$0xff]
    %v300 = vld [vmem:[%s3 + $0xa0] sm:$0xff]
    %v301 = vld [vmem:[%s3 + $0xa8] sm:$0xff]
    %v302 = vld [vmem:[%s3 + $0xb0] sm:$0xff]
    %v303 = vld [vmem:[%s3 + $0xb8] sm:$0xff]
    %v304 = vld [vmem:[%s3 + $0xc0] sm:$0xff]
    %v305 = vld [vmem:[%s3 + $0xc8] sm:$0xff]
    %v306 = vld [vmem:[%s3 + $0xd0] sm:$0xff]
    %v307 = vld [vmem:[%s3 + $0xd8] sm:$0xff]
    %v308 = vld [vmem:[%s3 + $0xe0] sm:$0xff]
    %v309 = vld [vmem:[%s3 + $0xe8] sm:$0xff]
    %v310 = vld [vmem:[%s3 + $0xf0] sm:$0xff]
    %v311 = vld [vmem:[%s3 + $0xf8] sm:$0xff]
    %v312 = vld [vmem:[%s3 + $0x100] sm:$0xff]
    %v313 = vld [vmem:[%s3 + $0x108] sm:$0xff]
    %v314 = vld [vmem:[%s3 + $0x110] sm:$0xff]
    %v315 = vld [vmem:[%s3 + $0x118] sm:$0xff]
    %v316 = vld [vmem:[%s3 + $0x120] sm:$0xff]
    %v317 = vld [vmem:[%s3 + $0x128] sm:$0xff]
    %v318 = vld [vmem:[%s3 + $0x130] sm:$0xff]
    %v319 = vld [vmem:[%s3 + $0x138] sm:$0xff]
    %v320 = vld [vmem:[%s3 + $0x140] sm:$0xff]
    %v321 = vld [vmem:[%s3 + $0x148] sm:$0xff]
    %v322 = vld [vmem:[%s3 + $0x150] sm:$0xff]
    %v323 = vld [vmem:[%s3 + $0x158] sm:$0xff]
    %v324 = vld [vmem:[%s3 + $0x160] sm:$0xff]
    %v325 = vld [vmem:[%s3 + $0x168] sm:$0xff]
    %v326 = vld [vmem:[%s3 + $0x170] sm:$0xff]
    %v327 = vld [vmem:[%s3 + $0x178] sm:$0xff]
    %v328 = vld [vmem:[%s3 + $0x180] sm:$0xff]
    %v329 = vld [vmem:[%s3 + $0x188] sm:$0xff]
    %v330 = vld [vmem:[%s3 + $0x190] sm:$0xff]
    %v331 = vld [vmem:[%s3 + $0x198] sm:$0xff]
    %v332 = vld [vmem:[%s3 + $0x1a0] sm:$0xff]
    %v333 = vld [vmem:[%s3 + $0x1a8] sm:$0xff]
    %v334 = vld [vmem:[%s3 + $0x1b0] sm:$0xff]
    %v335 = vld [vmem:[%s3 + $0x1b8] sm:$0xff]
    %v336 = vld [vmem:[%s3 + $0x1c0] sm:$0xff]
    %v337 = vld [vmem:[%s3 + $0x1c8] sm:$0xff]
    %v338 = vld [vmem:[%s3 + $0x1d0] sm:$0xff]
    %v339 = vld [vmem:[%s3 + $0x1d8] sm:$0xff]
    %v340 = vld [vmem:[%s3 + $0x1e0] sm:$0xff]
    %v341 = vld [vmem:[%s3 + $0x1e8] sm:$0xff]
    %v342 = vld [vmem:[%s3 + $0x1f0] sm:$0xff]
    %v343 = vld [vmem:[%s3 + $0x1f8] sm:$0xff]
    %v344 = vld [vmem:[%s3 + $0x200] sm:$0xff]
    %v345 = vld [vmem:[%s3 + $0x208] sm:$0xff]
    %v346 = vld [vmem:[%s3 + $0x210] sm:$0xff]
    %v347 = vld [vmem:[%s3 + $0x218] sm:$0xff]
    %v348 = vld [vmem:[%s3 + $0x220] sm:$0xff]
    %v349 = vld [vmem:[%s3 + $0x228] sm:$0xff]
    %v350 = vld [vmem:[%s3 + $0x230] sm:$0xff]
    %v351 = vld [vmem:[%s3 + $0x238] sm:$0xff]
    %v352 = vld [vmem:[%s3 + $0x240] sm:$0xff]
    %v353 = vld [vmem:[%s3 + $0x248] sm:$0xff]
    %v354 = vld [vmem:[%s3 + $0x250] sm:$0xff]
    %v355 = vld [vmem:[%s3 + $0x258] sm:$0xff]
    %v356 = vld [vmem:[%s3 + $0x260] sm:$0xff]
    %v357 = vld [vmem:[%s3 + $0x268] sm:$0xff]
    %v358 = vld [vmem:[%s3 + $0x270] sm:$0xff]
    %v359 = vld [vmem:[%s3 + $0x278] sm:$0xff]
    %v360 = vld [vmem:[%s3 + $0x280] sm:$0xff]
    %v361 = vld [vmem:[%s3 + $0x288] sm:$0xff]
    %v362 = vld [vmem:[%s3 + $0x290] sm:$0xff]
    %v363 = vld [vmem:[%s3 + $0x298] sm:$0xff]
    %v364 = vld [vmem:[%s3 + $0x2a0] sm:$0xff]
    %v365 = vld [vmem:[%s3 + $0x2a8] sm:$0xff]
    %v366 = vld [vmem:[%s3 + $0x2b0] sm:$0xff]
    %v367 = vld [vmem:[%s3 + $0x2b8] sm:$0xff]
    %v368 = vld [vmem:[%s3 + $0x2c0] sm:$0xff]
    %v369 = vld [vmem:[%s3 + $0x2c8] sm:$0xff]
    %v370 = vld [vmem:[%s3 + $0x2d0] sm:$0xff]
    %v371 = vld [vmem:[%s3 + $0x2d8] sm:$0xff]
    %v372 = vld [vmem:[%s3 + $0x2e0] sm:$0xff]
    %v373 = vld [vmem:[%s3 + $0x2e8] sm:$0xff]
    %v374 = vld [vmem:[%s3 + $0x2f0] sm:$0xff]
    %v375 = vld [vmem:[%s3 + $0x2f8] sm:$0xff]
    %v376 = vld [vmem:[%s3 + $0x300] sm:$0xff]
    %v377 = vld [vmem:[%s3 + $0x308] sm:$0xff]
    %v378 = vld [vmem:[%s3 + $0x310] sm:$0xff]
    %v379 = vld [vmem:[%s3 + $0x318] sm:$0xff]
    %v380 = vld [vmem:[%s3 + $0x320] sm:$0xff]
    %v381 = vld [vmem:[%s3 + $0x328] sm:$0xff]
    %v382 = vld [vmem:[%s3 + $0x330] sm:$0xff]
    %v383 = vld [vmem:[%s3 + $0x338] sm:$0xff]
    %v384 = vld [vmem:[%s3 + $0x340] sm:$0xff]
    %v385 = vld [vmem:[%s3 + $0x348] sm:$0xff]
    %v386 = vld [vmem:[%s3 + $0x350] sm:$0xff]
    %v387 = vld [vmem:[%s3 + $0x358] sm:$0xff]
    %v388 = vld [vmem:[%s3 + $0x360] sm:$0xff]
    %v389 = vld [vmem:[%s3 + $0x368] sm:$0xff]
    %v390 = vld [vmem:[%s3 + $0x370] sm:$0xff]
    %v391 = vld [vmem:[%s3 + $0x378] sm:$0xff]
    %v392 = vld [vmem:[%s3 + $0x380] sm:$0xff]
    %v393 = vld [vmem:[%s3 + $0x388] sm:$0xff]
    %v394 = vld [vmem:[%s3 + $0x390] sm:$0xff]
    %v395 = vld [vmem:[%s3 + $0x398] sm:$0xff]
    %v396 = vld [vmem:[%s3 + $0x3a0] sm:$0xff]
    %v397 = vld [vmem:[%s3 + $0x3a8] sm:$0xff]
    %v398 = vld [vmem:[%s3 + $0x3b0] sm:$0xff]
    %v399 = vld [vmem:[%s3 + $0x3b8] sm:$0xff]
    %v400 = vld [vmem:[%s3 + $0x3c0] sm:$0xff]
    %v401 = vld [vmem:[%s3 + $0x3c8] sm:$0xff]
    %v402 = vld [vmem:[%s3 + $0x3d0] sm:$0xff]
    %v403 = vld [vmem:[%s3 + $0x3d8] sm:$0xff]
    %v404 = vld [vmem:[%s3 + $0x3e0] sm:$0xff]
    %v405 = vld [vmem:[%s3 + $0x3e8] sm:$0xff]
    %v406 = vld [vmem:[%s3 + $0x3f0] sm:$0xff]
    %v407 = vld [vmem:[%s3 + $0x3f8] sm:$0xff]
    %v408 = vld [vmem:[%s3 + $0x400] sm:$0xff]
    %v409 = vld [vmem:[%s3 + $0x408] sm:$0xff]
    %v410 = vld [vmem:[%s3 + $0x410] sm:$0xff]
    %v411 = vld [vmem:[%s3 + $0x418] sm:$0xff]
    %v412 = vld [vmem:[%s3 + $0x420] sm:$0xff]
    %v413 = vld [vmem:[%s3 + $0x428] sm:$0xff]
    %v414 = vld [vmem:[%s3 + $0x430] sm:$0xff]
    %v415 = vld [vmem:[%s3 + $0x438] sm:$0xff]
    %v416 = vld [vmem:[%s3 + $0x440] sm:$0xff]
    %v417 = vld [vmem:[%s3 + $0x448] sm:$0xff]
    %v418 = vld [vmem:[%s3 + $0x450] sm:$0xff]
    %v419 = vld [vmem:[%s3 + $0x458] sm:$0xff]
    %v420 = vld [vmem:[%s3 + $0x460] sm:$0xff]
    %v421 = vld [vmem:[%s3 + $0x468] sm:$0xff]
    %v422 = vld [vmem:[%s3 + $0x470] sm:$0xff]
    %v423 = vld [vmem:[%s3 + $0x478] sm:$0xff]
    %v424 = vld [vmem:[%s4] sm:$0x7]
    %v426 = vlaneseq
    %v427 = vshrl.u32 %v426, 7
    %v428 = vsub.s32 0, %v427
    %v429 = vrot.slane %v424, %v428
    %v430 = vlaneseq
    %v431 = vshrl.u32 %v430, 7
    %v432 = vsub.s32 1, %v431
    %v433 = vrot.slane %v424, %v432
    %v434 = vlaneseq
    %v435 = vshrl.u32 %v434, 7
    %v436 = vsub.s32 2, %v435
    %v437 = vrot.slane %v424, %v436
    %441 = vmatprep.subr.mxu0 %v281
    %442 = vmatpush1.msra.mxu0 %v280
    %443 = vmatprep.subr.mxu0 %v284
    %444 = vmatpush1.msra.mxu0 %v283
    %445 = vmatprep.subr.mxu0 %v287
    %446 = vmatpush1.msra.mxu0 %v286
    %447 = vmatprep.subr.mxu0 %v290
    %448 = vmatpush1.msra.mxu0 %v289
    %449 = vmatprep.subr.mxu0 %v293
    %450 = vmatpush1.msra.mxu0 %v292
    %451 = vmatprep.subr.mxu0 %v296
    %452 = vmatpush1.msra.mxu0 %v295
    %453 = vmatprep.subr.mxu0 %v299
    %454 = vmatpush1.msra.mxu0 %v298
    %455 = vmatprep.subr.mxu0 %v302
    %456 = vmatpush1.msra.mxu0 %v301
    %457 = vmatprep.subr.mxu0 %v305
    %458 = vmatpush1.msra.mxu0 %v304
    %459 = vmatprep.subr.mxu0 %v308
    %460 = vmatpush1.msra.mxu0 %v307
    %461 = vmatprep.subr.mxu0 %v311
    %462 = vmatpush1.msra.mxu0 %v310
    %463 = vmatprep.subr.mxu0 %v314
    %464 = vmatpush1.msra.mxu0 %v313
    %465 = vmatprep.subr.mxu0 %v317
    %466 = vmatpush1.msra.mxu0 %v316
    %467 = vmatprep.subr.mxu0 %v320
    %468 = vmatpush1.msra.mxu0 %v319
    %469 = vmatprep.subr.mxu0 %v323
    %470 = vmatpush1.msra.mxu0 %v322
    %471 = vmatprep.subr.mxu0 %v326
    %472 = vmatpush1.msra.mxu0 %v325
    %473 = vmatprep.subr.mxu0 %v329
    %474 = vmatpush1.msra.mxu0 %v328
    %475 = vmatprep.subr.mxu0 %v332
    %476 = vmatpush1.msra.mxu0 %v331
    %477 = vmatprep.subr.mxu0 %v335
    %478 = vmatpush1.msra.mxu0 %v334
    %479 = vmatprep.subr.mxu0 %v338
    %480 = vmatpush1.msra.mxu0 %v337
    %481 = vmatprep.subr.mxu0 %v341
    %482 = vmatpush1.msra.mxu0 %v340
    %483 = vmatprep.subr.mxu0 %v344
    %484 = vmatpush1.msra.mxu0 %v343
    %485 = vmatprep.subr.mxu0 %v347
    %486 = vmatpush1.msra.mxu0 %v346
    %487 = vmatprep.subr.mxu0 %v350
    %488 = vmatpush1.msra.mxu0 %v349
    %489 = vmatprep.subr.mxu0 %v353
    %490 = vmatpush1.msra.mxu0 %v352
    %491 = vmatprep.subr.mxu0 %v356
    %492 = vmatpush1.msra.mxu0 %v355
    %493 = vmatprep.subr.mxu0 %v359
    %494 = vmatpush1.msra.mxu0 %v358
    %495 = vmatprep.subr.mxu0 %v362
    %496 = vmatpush1.msra.mxu0 %v361
    %497 = vmatprep.subr.mxu0 %v365
    %498 = vmatpush1.msra.mxu0 %v364
    %499 = vmatprep.subr.mxu0 %v368
    %500 = vmatpush1.msra.mxu0 %v367
    %501 = vmatprep.subr.mxu0 %v371
    %502 = vmatpush1.msra.mxu0 %v370
    %503 = vmatprep.subr.mxu0 %v374
    %504 = vmatpush1.msra.mxu0 %v373
    %505 = vmatprep.mubr.f32.mxu0 %v278
    %506 = vmatmul.mubr.f32.gmra.mrb[0].mxu0 %v277
    %v507 = vpop.f32.mrb[0].mxu0
    %v508 = vadd.f32 %v429, %v507
    %v509 = vpop.f32.mrb[0].mxu0
    %v510 = vadd.f32 %v433, %v509
    %511 = vdwg.mxu0
    %512 = vmatprep.subr.mxu0 %v377
    %513 = vmatpush1.msra.mxu0 %v376
    %514 = vmatprep.subr.mxu0 %v380
    %515 = vmatpush1.msra.mxu0 %v379
    %516 = vmatprep.subr.mxu0 %v383
    %517 = vmatpush1.msra.mxu0 %v382
    %518 = vmatprep.subr.mxu0 %v386
    %519 = vmatpush1.msra.mxu0 %v385
    %520 = vmatprep.subr.mxu0 %v389
    %521 = vmatpush1.msra.mxu0 %v388
    %522 = vmatprep.subr.mxu0 %v392
    %523 = vmatpush1.msra.mxu0 %v391
    %524 = vmatprep.subr.mxu0 %v395
    %525 = vmatpush1.msra.mxu0 %v394
    %526 = vmatprep.subr.mxu0 %v398
    %527 = vmatpush1.msra.mxu0 %v397
    %528 = vmatprep.subr.mxu0 %v401
    %529 = vmatpush1.msra.mxu0 %v400
    %530 = vmatprep.subr.mxu0 %v404
    %531 = vmatpush1.msra.mxu0 %v403
    %532 = vmatprep.subr.mxu0 %v407
    %533 = vmatpush1.msra.mxu0 %v406
    %534 = vmatprep.subr.mxu0 %v410
    %535 = vmatpush1.msra.mxu0 %v409
    %536 = vmatprep.subr.mxu0 %v413
    %537 = vmatpush1.msra.mxu0 %v412
    %538 = vmatprep.subr.mxu0 %v416
    %539 = vmatpush1.msra.mxu0 %v415
    %540 = vmatprep.subr.mxu0 %v419
    %541 = vmatpush1.msra.mxu0 %v418
    %542 = vmatprep.subr.mxu0 %v422
    %543 = vmatpush1.msra.mxu0 %v421
    %544 = vmatprep.subr.mxu0 0.0
    %545 = vmatpush1.msra.mxu0 0.0
    %546 = vmatprep.subr.mxu0 0.0
    %547 = vmatpush1.msra.mxu0 0.0
    %548 = vmatprep.subr.mxu0 0.0
    %549 = vmatpush1.msra.mxu0 0.0
    %550 = vmatprep.subr.mxu0 0.0
    %551 = vmatpush1.msra.mxu0 0.0
    %552 = vmatprep.subr.mxu0 0.0
    %553 = vmatpush1.msra.mxu0 0.0
    %554 = vmatprep.subr.mxu0 0.0
    %555 = vmatpush1.msra.mxu0 0.0
    %556 = vmatprep.subr.mxu0 0.0
    %557 = vmatpush1.msra.mxu0 0.0
    %558 = vmatprep.subr.mxu0 0.0
    %559 = vmatpush1.msra.mxu0 0.0
    %560 = vmatprep.subr.mxu0 0.0
    %561 = vmatpush1.msra.mxu0 0.0
    %562 = vmatprep.subr.mxu0 0.0
    %563 = vmatpush1.msra.mxu0 0.0
    %564 = vmatprep.subr.mxu0 0.0
    %565 = vmatpush1.msra.mxu0 0.0
    %566 = vmatprep.subr.mxu0 0.0
    %567 = vmatpush1.msra.mxu0 0.0
    %568 = vmatprep.subr.mxu0 0.0
    %569 = vmatpush1.msra.mxu0 0.0
    %570 = vmatprep.subr.mxu0 0.0
    %571 = vmatpush1.msra.mxu0 0.0
    %572 = vmatprep.subr.mxu0 0.0
    %573 = vmatpush1.msra.mxu0 0.0
    %574 = vmatprep.subr.mxu0 0.0
    %575 = vmatpush1.msra.mxu0 0.0
    %576 = vmatprep.mubr.f32.mxu0 0.0
    %577 = vmatmul.mubr.f32.gmra.mrb[0].mxu0 %v279
    %v578 = vpop.f32.mrb[0].mxu0
    %v579 = vadd.f32 %v508, %v578
    %v580 = vpop.f32.mrb[0].mxu0
    %v581 = vadd.f32 %v510, %v580
    %582 = vdwg.mxu0
    %583 = vmatprep.subr.mxu0 0.0
    %584 = vmatpush1.msra.mxu0 %v282
    %585 = vmatprep.subr.mxu0 0.0
    %586 = vmatpush1.msra.mxu0 %v285
    %587 = vmatprep.subr.mxu0 0.0
    %588 = vmatpush1.msra.mxu0 %v288
    %589 = vmatprep.subr.mxu0 0.0
    %590 = vmatpush1.msra.mxu0 %v291
    %591 = vmatprep.subr.mxu0 0.0
    %592 = vmatpush1.msra.mxu0 %v294
    %593 = vmatprep.subr.mxu0 0.0
    %594 = vmatpush1.msra.mxu0 %v297
    %595 = vmatprep.subr.mxu0 0.0
    %596 = vmatpush1.msra.mxu0 %v300
    %597 = vmatprep.subr.mxu0 0.0
    %598 = vmatpush1.msra.mxu0 %v303
    %599 = vmatprep.subr.mxu0 0.0
    %600 = vmatpush1.msra.mxu0 %v306
    %601 = vmatprep.subr.mxu0 0.0
    %602 = vmatpush1.msra.mxu0 %v309
    %603 = vmatprep.subr.mxu0 0.0
    %604 = vmatpush1.msra.mxu0 %v312
    %605 = vmatprep.subr.mxu0 0.0
    %606 = vmatpush1.msra.mxu0 %v315
    %607 = vmatprep.subr.mxu0 0.0
    %608 = vmatpush1.msra.mxu0 %v318
    %609 = vmatprep.subr.mxu0 0.0
    %610 = vmatpush1.msra.mxu0 %v321
    %611 = vmatprep.subr.mxu0 0.0
    %612 = vmatpush1.msra.mxu0 %v324
    %613 = vmatprep.subr.mxu0 0.0
    %614 = vmatpush1.msra.mxu0 %v327
    %615 = vmatprep.subr.mxu0 0.0
    %616 = vmatpush1.msra.mxu0 %v330
    %617 = vmatprep.subr.mxu0 0.0
    %618 = vmatpush1.msra.mxu0 %v333
    %619 = vmatprep.subr.mxu0 0.0
    %620 = vmatpush1.msra.mxu0 %v336
    %621 = vmatprep.subr.mxu0 0.0
    %622 = vmatpush1.msra.mxu0 %v339
    %623 = vmatprep.subr.mxu0 0.0
    %624 = vmatpush1.msra.mxu0 %v342
    %625 = vmatprep.subr.mxu0 0.0
    %626 = vmatpush1.msra.mxu0 %v345
    %627 = vmatprep.subr.mxu0 0.0
    %628 = vmatpush1.msra.mxu0 %v348
    %629 = vmatprep.subr.mxu0 0.0
    %630 = vmatpush1.msra.mxu0 %v351
    %631 = vmatprep.subr.mxu0 0.0
    %632 = vmatpush1.msra.mxu0 %v354
    %633 = vmatprep.subr.mxu0 0.0
    %634 = vmatpush1.msra.mxu0 %v357
    %635 = vmatprep.subr.mxu0 0.0
    %636 = vmatpush1.msra.mxu0 %v360
    %637 = vmatprep.subr.mxu0 0.0
    %638 = vmatpush1.msra.mxu0 %v363
    %639 = vmatprep.subr.mxu0 0.0
    %640 = vmatpush1.msra.mxu0 %v366
    %641 = vmatprep.subr.mxu0 0.0
    %642 = vmatpush1.msra.mxu0 %v369
    %643 = vmatprep.subr.mxu0 0.0
    %644 = vmatpush1.msra.mxu0 %v372
    %645 = vmatprep.subr.mxu0 0.0
    %646 = vmatpush1.msra.mxu0 %v375
    %647 = vmatprep.mubr.f32.mxu0 %v278
    %648 = vmatmul.mubr.f32.gmra.mrb[0].mxu0 %v277
    %v649 = vpop.f32.mrb[0].mxu0
    %v650 = vadd.f32 %v437, %v649
    %v651 = vpop.f32.mrb[0].mxu0
    %652 = vdwg.mxu0
    %653 = vmatprep.subr.mxu0 0.0
    %654 = vmatpush1.msra.mxu0 %v378
    %655 = vmatprep.subr.mxu0 0.0
    %656 = vmatpush1.msra.mxu0 %v381
    %657 = vmatprep.subr.mxu0 0.0
    %658 = vmatpush1.msra.mxu0 %v384
    %659 = vmatprep.subr.mxu0 0.0
    %660 = vmatpush1.msra.mxu0 %v387
    %661 = vmatprep.subr.mxu0 0.0
    %662 = vmatpush1.msra.mxu0 %v390
    %663 = vmatprep.subr.mxu0 0.0
    %664 = vmatpush1.msra.mxu0 %v393
    %665 = vmatprep.subr.mxu0 0.0
    %666 = vmatpush1.msra.mxu0 %v396
    %667 = vmatprep.subr.mxu0 0.0
    %668 = vmatpush1.msra.mxu0 %v399
    %669 = vmatprep.subr.mxu0 0.0
    %670 = vmatpush1.msra.mxu0 %v402
    %671 = vmatprep.subr.mxu0 0.0
    %672 = vmatpush1.msra.mxu0 %v405
    %673 = vmatprep.subr.mxu0 0.0
    %674 = vmatpush1.msra.mxu0 %v408
    %675 = vmatprep.subr.mxu0 0.0
    %676 = vmatpush1.msra.mxu0 %v411
    %677 = vmatprep.subr.mxu0 0.0
    %678 = vmatpush1.msra.mxu0 %v414
    %679 = vmatprep.subr.mxu0 0.0
    %680 = vmatpush1.msra.mxu0 %v417
    %681 = vmatprep.subr.mxu0 0.0
    %682 = vmatpush1.msra.mxu0 %v420
    %683 = vmatprep.subr.mxu0 0.0
    %684 = vmatpush1.msra.mxu0 %v423
    %685 = vmatprep.subr.mxu0 0.0
    %686 = vmatpush1.msra.mxu0 0.0
    %687 = vmatprep.subr.mxu0 0.0
    %688 = vmatpush1.msra.mxu0 0.0
    %689 = vmatprep.subr.mxu0 0.0
    %690 = vmatpush1.msra.mxu0 0.0
    %691 = vmatprep.subr.mxu0 0.0
    %692 = vmatpush1.msra.mxu0 0.0
    %693 = vmatprep.subr.mxu0 0.0
    %694 = vmatpush1.msra.mxu0 0.0
    %695 = vmatprep.subr.mxu0 0.0
    %696 = vmatpush1.msra.mxu0 0.0
    %697 = vmatprep.subr.mxu0 0.0
    %698 = vmatpush1.msra.mxu0 0.0
    %699 = vmatprep.subr.mxu0 0.0
    %700 = vmatpush1.msra.mxu0 0.0
    %701 = vmatprep.subr.mxu0 0.0
    %702 = vmatpush1.msra.mxu0 0.0
    %703 = vmatprep.subr.mxu0 0.0
    %704 = vmatpush1.msra.mxu0 0.0
    %705 = vmatprep.subr.mxu0 0.0
    %706 = vmatpush1.msra.mxu0 0.0
    %707 = vmatprep.subr.mxu0 0.0
    %708 = vmatpush1.msra.mxu0 0.0
    %709 = vmatprep.subr.mxu0 0.0
    %710 = vmatpush1.msra.mxu0 0.0
    %711 = vmatprep.subr.mxu0 0.0
    %712 = vmatpush1.msra.mxu0 0.0
    %713 = vmatprep.subr.mxu0 0.0
    %714 = vmatpush1.msra.mxu0 0.0
    %715 = vmatprep.subr.mxu0 0.0
    %716 = vmatpush1.msra.mxu0 0.0
    %717 = vmatprep.mubr.f32.mxu0 0.0
    %718 = vmatmul.mubr.f32.gmra.mrb[0].mxu0 %v279
    %v719 = vpop.f32.mrb[0].mxu0
    %v720 = vadd.f32 %v650, %v719
    %v721 = vpop.f32.mrb[0].mxu0
    %722 = vdwg.mxu0
    %v723 = vmax.f32 %v579, 0.0
    %v724 = vmax.f32 %v581, 0.0
    %v725 = vmax.f32 %v720, 0.0
    %v726 = vld [vmem:[%s5] sm:$0xff]
    %v727 = vld [vmem:[%s5 + $0x8] sm:$0xff]
    %v728 = vld [vmem:[%s5 + $0x10] sm:$0xff]
    %v729 = vld [vmem:[%s5 + $0x18] sm:$0xff]
    %v730 = vld [vmem:[%s5 + $0x20] sm:$0xff]
    %v731 = vld [vmem:[%s5 + $0x28] sm:$0xff]
    %v732 = vld [vmem:[%s5 + $0x30] sm:$0xff]
    %v733 = vld [vmem:[%s5 + $0x38] sm:$0xff]
    %v734 = vld [vmem:[%s5 + $0x40] sm:$0xff]
    %v735 = vld [vmem:[%s5 + $0x48] sm:$0xff]
    %v736 = vld [vmem:[%s5 + $0x50] sm:$0xff]
    %v737 = vld [vmem:[%s5 + $0x58] sm:$0xff]
    %v738 = vld [vmem:[%s5 + $0x60] sm:$0xff]
    %v739 = vld [vmem:[%s5 + $0x68] sm:$0xff]
    %v740 = vld [vmem:[%s5 + $0x70] sm:$0xff]
    %v741 = vld [vmem:[%s5 + $0x78] sm:$0xff]
    %v742 = vld [vmem:[%s5 + $0x80] sm:$0xff]
    %v743 = vld [vmem:[%s5 + $0x88] sm:$0xff]
    %v744 = vld [vmem:[%s5 + $0x90] sm:$0xff]
    %v745 = vld [vmem:[%s5 + $0x98] sm:$0xff]
    %v746 = vld [vmem:[%s5 + $0xa0] sm:$0xff]
    %v747 = vld [vmem:[%s5 + $0xa8] sm:$0xff]
    %v748 = vld [vmem:[%s5 + $0xb0] sm:$0xff]
    %v749 = vld [vmem:[%s5 + $0xb8] sm:$0xff]
    %v750 = vld [vmem:[%s5 + $0xc0] sm:$0xff]
    %v751 = vld [vmem:[%s5 + $0xc8] sm:$0xff]
    %v752 = vld [vmem:[%s5 + $0xd0] sm:$0xff]
    %v753 = vld [vmem:[%s5 + $0xd8] sm:$0xff]
    %v754 = vld [vmem:[%s5 + $0xe0] sm:$0xff]
    %v755 = vld [vmem:[%s5 + $0xe8] sm:$0xff]
    %v756 = vld [vmem:[%s5 + $0xf0] sm:$0xff]
    %v757 = vld [vmem:[%s5 + $0xf8] sm:$0xff]
    %v758 = vld [vmem:[%s5 + $0x100] sm:$0xff]
    %v759 = vld [vmem:[%s5 + $0x108] sm:$0xff]
    %v760 = vld [vmem:[%s5 + $0x110] sm:$0xff]
    %v761 = vld [vmem:[%s5 + $0x118] sm:$0xff]
    %v762 = vld [vmem:[%s5 + $0x120] sm:$0xff]
    %v763 = vld [vmem:[%s5 + $0x128] sm:$0xff]
    %v764 = vld [vmem:[%s5 + $0x130] sm:$0xff]
    %v765 = vld [vmem:[%s5 + $0x138] sm:$0xff]
    %v766 = vld [vmem:[%s5 + $0x140] sm:$0xff]
    %v767 = vld [vmem:[%s5 + $0x148] sm:$0xff]
    %v768 = vld [vmem:[%s5 + $0x150] sm:$0xff]
    %v769 = vld [vmem:[%s5 + $0x158] sm:$0xff]
    %v770 = vld [vmem:[%s5 + $0x160] sm:$0xff]
    %v771 = vld [vmem:[%s5 + $0x168] sm:$0xff]
    %v772 = vld [vmem:[%s5 + $0x170] sm:$0xff]
    %v773 = vld [vmem:[%s5 + $0x178] sm:$0xff]
    %v774 = vld [vmem:[%s5 + $0x180] sm:$0xff]
    %v775 = vld [vmem:[%s5 + $0x188] sm:$0xff]
    %v776 = vld [vmem:[%s5 + $0x190] sm:$0xff]
    %v777 = vld [vmem:[%s5 + $0x198] sm:$0xff]
    %v778 = vld [vmem:[%s5 + $0x1a0] sm:$0xff]
    %v779 = vld [vmem:[%s5 + $0x1a8] sm:$0xff]
    %v780 = vld [vmem:[%s5 + $0x1b0] sm:$0xff]
    %v781 = vld [vmem:[%s5 + $0x1b8] sm:$0xff]
    %v782 = vld [vmem:[%s5 + $0x1c0] sm:$0xff]
    %v783 = vld [vmem:[%s5 + $0x1c8] sm:$0xff]
    %v784 = vld [vmem:[%s5 + $0x1d0] sm:$0xff]
    %v785 = vld [vmem:[%s5 + $0x1d8] sm:$0xff]
    %v786 = vld [vmem:[%s5 + $0x1e0] sm:$0xff]
    %v787 = vld [vmem:[%s5 + $0x1e8] sm:$0xff]
    %v788 = vld [vmem:[%s5 + $0x1f0] sm:$0xff]
    %v789 = vld [vmem:[%s5 + $0x1f8] sm:$0xff]
    %v790 = vld [vmem:[%s5 + $0x200] sm:$0xff]
    %v791 = vld [vmem:[%s5 + $0x208] sm:$0xff]
    %v792 = vld [vmem:[%s5 + $0x210] sm:$0xff]
    %v793 = vld [vmem:[%s5 + $0x218] sm:$0xff]
    %v794 = vld [vmem:[%s5 + $0x220] sm:$0xff]
    %v795 = vld [vmem:[%s5 + $0x228] sm:$0xff]
    %v796 = vld [vmem:[%s5 + $0x230] sm:$0xff]
    %v797 = vld [vmem:[%s5 + $0x238] sm:$0xff]
    %v798 = vld [vmem:[%s5 + $0x240] sm:$0xff]
    %v799 = vld [vmem:[%s5 + $0x248] sm:$0xff]
    %v800 = vld [vmem:[%s5 + $0x250] sm:$0xff]
    %v801 = vld [vmem:[%s5 + $0x258] sm:$0xff]
    %v802 = vld [vmem:[%s5 + $0x260] sm:$0xff]
    %v803 = vld [vmem:[%s5 + $0x268] sm:$0xff]
    %v804 = vld [vmem:[%s5 + $0x270] sm:$0xff]
    %v805 = vld [vmem:[%s5 + $0x278] sm:$0xff]
    %v806 = vld [vmem:[%s5 + $0x280] sm:$0xff]
    %v807 = vld [vmem:[%s5 + $0x288] sm:$0xff]
    %v808 = vld [vmem:[%s5 + $0x290] sm:$0xff]
    %v809 = vld [vmem:[%s5 + $0x298] sm:$0xff]
    %v810 = vld [vmem:[%s5 + $0x2a0] sm:$0xff]
    %v811 = vld [vmem:[%s5 + $0x2a8] sm:$0xff]
    %v812 = vld [vmem:[%s5 + $0x2b0] sm:$0xff]
    %v813 = vld [vmem:[%s5 + $0x2b8] sm:$0xff]
    %v814 = vld [vmem:[%s5 + $0x2c0] sm:$0xff]
    %v815 = vld [vmem:[%s5 + $0x2c8] sm:$0xff]
    %v816 = vld [vmem:[%s5 + $0x2d0] sm:$0xff]
    %v817 = vld [vmem:[%s5 + $0x2d8] sm:$0xff]
    %v818 = vld [vmem:[%s5 + $0x2e0] sm:$0xff]
    %v819 = vld [vmem:[%s5 + $0x2e8] sm:$0xff]
    %v820 = vld [vmem:[%s5 + $0x2f0] sm:$0xff]
    %v821 = vld [vmem:[%s5 + $0x2f8] sm:$0xff]
    %v822 = vld [vmem:[%s5 + $0x300] sm:$0xff]
    %v823 = vld [vmem:[%s5 + $0x308] sm:$0xff]
    %v824 = vld [vmem:[%s5 + $0x310] sm:$0xff]
    %v825 = vld [vmem:[%s5 + $0x318] sm:$0xff]
    %v826 = vld [vmem:[%s5 + $0x320] sm:$0xff]
    %v827 = vld [vmem:[%s5 + $0x328] sm:$0xff]
    %v828 = vld [vmem:[%s5 + $0x330] sm:$0xff]
    %v829 = vld [vmem:[%s5 + $0x338] sm:$0xff]
    %v830 = vld [vmem:[%s5 + $0x340] sm:$0xff]
    %v831 = vld [vmem:[%s5 + $0x348] sm:$0xff]
    %v832 = vld [vmem:[%s5 + $0x350] sm:$0xff]
    %v833 = vld [vmem:[%s5 + $0x358] sm:$0xff]
    %v834 = vld [vmem:[%s5 + $0x360] sm:$0xff]
    %v835 = vld [vmem:[%s5 + $0x368] sm:$0xff]
    %v836 = vld [vmem:[%s5 + $0x370] sm:$0xff]
    %v837 = vld [vmem:[%s5 + $0x378] sm:$0xff]
    %v838 = vld [vmem:[%s5 + $0x380] sm:$0xff]
    %v839 = vld [vmem:[%s5 + $0x388] sm:$0xff]
    %v840 = vld [vmem:[%s5 + $0x390] sm:$0xff]
    %v841 = vld [vmem:[%s5 + $0x398] sm:$0xff]
    %v842 = vld [vmem:[%s5 + $0x3a0] sm:$0xff]
    %v843 = vld [vmem:[%s5 + $0x3a8] sm:$0xff]
    %v844 = vld [vmem:[%s5 + $0x3b0] sm:$0xff]
    %v845 = vld [vmem:[%s5 + $0x3b8] sm:$0xff]
    %v846 = vld [vmem:[%s5 + $0x3c0] sm:$0xff]
    %v847 = vld [vmem:[%s5 + $0x3c8] sm:$0xff]
    %v848 = vld [vmem:[%s5 + $0x3d0] sm:$0xff]
    %v849 = vld [vmem:[%s5 + $0x3d8] sm:$0xff]
    %v850 = vld [vmem:[%s5 + $0x3e0] sm:$0xff]
    %v851 = vld [vmem:[%s5 + $0x3e8] sm:$0xff]
    %v852 = vld [vmem:[%s5 + $0x3f0] sm:$0xff]
    %v853 = vld [vmem:[%s5 + $0x3f8] sm:$0xff]
    %v854 = vld [vmem:[%s5 + $0x400] sm:$0xff]
    %v855 = vld [vmem:[%s5 + $0x408] sm:$0xff]
    %v856 = vld [vmem:[%s5 + $0x410] sm:$0xff]
    %v857 = vld [vmem:[%s5 + $0x418] sm:$0xff]
    %v858 = vld [vmem:[%s5 + $0x420] sm:$0xff]
    %v859 = vld [vmem:[%s5 + $0x428] sm:$0xff]
    %v860 = vld [vmem:[%s5 + $0x430] sm:$0xff]
    %v861 = vld [vmem:[%s5 + $0x438] sm:$0xff]
    %v862 = vld [vmem:[%s5 + $0x440] sm:$0xff]
    %v863 = vld [vmem:[%s5 + $0x448] sm:$0xff]
    %v864 = vld [vmem:[%s5 + $0x450] sm:$0xff]
    %v865 = vld [vmem:[%s5 + $0x458] sm:$0xff]
    %v866 = vld [vmem:[%s5 + $0x460] sm:$0xff]
    %v867 = vld [vmem:[%s5 + $0x468] sm:$0xff]
    %v868 = vld [vmem:[%s5 + $0x470] sm:$0xff]
    %v869 = vld [vmem:[%s5 + $0x478] sm:$0xff]
    %v870 = vld [vmem:[%s6] sm:$0x7]
    %v872 = vlaneseq
    %v873 = vshrl.u32 %v872, 7
    %v874 = vsub.s32 0, %v873
    %v875 = vrot.slane %v870, %v874
    %v876 = vlaneseq
    %v877 = vshrl.u32 %v876, 7
    %v878 = vsub.s32 1, %v877
    %v879 = vrot.slane %v870, %v878
    %v880 = vlaneseq
    %v881 = vshrl.u32 %v880, 7
    %v882 = vsub.s32 2, %v881
    %v883 = vrot.slane %v870, %v882
    %887 = vmatprep.subr.mxu0 %v727
    %888 = vmatpush1.msra.mxu0 %v726
    %889 = vmatprep.subr.mxu0 %v730
    %890 = vmatpush1.msra.mxu0 %v729
    %891 = vmatprep.subr.mxu0 %v733
    %892 = vmatpush1.msra.mxu0 %v732
    %893 = vmatprep.subr.mxu0 %v736
    %894 = vmatpush1.msra.mxu0 %v735
    %895 = vmatprep.subr.mxu0 %v739
    %896 = vmatpush1.msra.mxu0 %v738
    %897 = vmatprep.subr.mxu0 %v742
    %898 = vmatpush1.msra.mxu0 %v741
    %899 = vmatprep.subr.mxu0 %v745
    %900 = vmatpush1.msra.mxu0 %v744
    %901 = vmatprep.subr.mxu0 %v748
    %902 = vmatpush1.msra.mxu0 %v747
    %903 = vmatprep.subr.mxu0 %v751
    %904 = vmatpush1.msra.mxu0 %v750
    %905 = vmatprep.subr.mxu0 %v754
    %906 = vmatpush1.msra.mxu0 %v753
    %907 = vmatprep.subr.mxu0 %v757
    %908 = vmatpush1.msra.mxu0 %v756
    %909 = vmatprep.subr.mxu0 %v760
    %910 = vmatpush1.msra.mxu0 %v759
    %911 = vmatprep.subr.mxu0 %v763
    %912 = vmatpush1.msra.mxu0 %v762
    %913 = vmatprep.subr.mxu0 %v766
    %914 = vmatpush1.msra.mxu0 %v765
    %915 = vmatprep.subr.mxu0 %v769
    %916 = vmatpush1.msra.mxu0 %v768
    %917 = vmatprep.subr.mxu0 %v772
    %918 = vmatpush1.msra.mxu0 %v771
    %919 = vmatprep.subr.mxu0 %v775
    %920 = vmatpush1.msra.mxu0 %v774
    %921 = vmatprep.subr.mxu0 %v778
    %922 = vmatpush1.msra.mxu0 %v777
    %923 = vmatprep.subr.mxu0 %v781
    %924 = vmatpush1.msra.mxu0 %v780
    %925 = vmatprep.subr.mxu0 %v784
    %926 = vmatpush1.msra.mxu0 %v783
    %927 = vmatprep.subr.mxu0 %v787
    %928 = vmatpush1.msra.mxu0 %v786
    %929 = vmatprep.subr.mxu0 %v790
    %930 = vmatpush1.msra.mxu0 %v789
    %931 = vmatprep.subr.mxu0 %v793
    %932 = vmatpush1.msra.mxu0 %v792
    %933 = vmatprep.subr.mxu0 %v796
    %934 = vmatpush1.msra.mxu0 %v795
    %935 = vmatprep.subr.mxu0 %v799
    %936 = vmatpush1.msra.mxu0 %v798
    %937 = vmatprep.subr.mxu0 %v802
    %938 = vmatpush1.msra.mxu0 %v801
    %939 = vmatprep.subr.mxu0 %v805
    %940 = vmatpush1.msra.mxu0 %v804
    %941 = vmatprep.subr.mxu0 %v808
    %942 = vmatpush1.msra.mxu0 %v807
    %943 = vmatprep.subr.mxu0 %v811
    %944 = vmatpush1.msra.mxu0 %v810
    %945 = vmatprep.subr.mxu0 %v814
    %946 = vmatpush1.msra.mxu0 %v813
    %947 = vmatprep.subr.mxu0 %v817
    %948 = vmatpush1.msra.mxu0 %v816
    %949 = vmatprep.subr.mxu0 %v820
    %950 = vmatpush1.msra.mxu0 %v819
    %951 = vmatprep.mubr.f32.mxu0 %v724
    %952 = vmatmul.mubr.f32.gmra.mrb[0].mxu0 %v723
    %v953 = vpop.f32.mrb[0].mxu0
    %v954 = vadd.f32 %v875, %v953
    %v955 = vpop.f32.mrb[0].mxu0
    %v956 = vadd.f32 %v879, %v955
    %957 = vdwg.mxu0
    %958 = vmatprep.subr.mxu0 %v823
    %959 = vmatpush1.msra.mxu0 %v822
    %960 = vmatprep.subr.mxu0 %v826
    %961 = vmatpush1.msra.mxu0 %v825
    %962 = vmatprep.subr.mxu0 %v829
    %963 = vmatpush1.msra.mxu0 %v828
    %964 = vmatprep.subr.mxu0 %v832
    %965 = vmatpush1.msra.mxu0 %v831
    %966 = vmatprep.subr.mxu0 %v835
    %967 = vmatpush1.msra.mxu0 %v834
    %968 = vmatprep.subr.mxu0 %v838
    %969 = vmatpush1.msra.mxu0 %v837
    %970 = vmatprep.subr.mxu0 %v841
    %971 = vmatpush1.msra.mxu0 %v840
    %972 = vmatprep.subr.mxu0 %v844
    %973 = vmatpush1.msra.mxu0 %v843
    %974 = vmatprep.subr.mxu0 %v847
    %975 = vmatpush1.msra.mxu0 %v846
    %976 = vmatprep.subr.mxu0 %v850
    %977 = vmatpush1.msra.mxu0 %v849
    %978 = vmatprep.subr.mxu0 %v853
    %979 = vmatpush1.msra.mxu0 %v852
    %980 = vmatprep.subr.mxu0 %v856
    %981 = vmatpush1.msra.mxu0 %v855
    %982 = vmatprep.subr.mxu0 %v859
    %983 = vmatpush1.msra.mxu0 %v858
    %984 = vmatprep.subr.mxu0 %v862
    %985 = vmatpush1.msra.mxu0 %v861
    %986 = vmatprep.subr.mxu0 %v865
    %987 = vmatpush1.msra.mxu0 %v864
    %988 = vmatprep.subr.mxu0 %v868
    %989 = vmatpush1.msra.mxu0 %v867
    %990 = vmatprep.subr.mxu0 0.0
    %991 = vmatpush1.msra.mxu0 0.0
    %992 = vmatprep.subr.mxu0 0.0
    %993 = vmatpush1.msra.mxu0 0.0
    %994 = vmatprep.subr.mxu0 0.0
    %995 = vmatpush1.msra.mxu0 0.0
    %996 = vmatprep.subr.mxu0 0.0
    %997 = vmatpush1.msra.mxu0 0.0
    %998 = vmatprep.subr.mxu0 0.0
    %999 = vmatpush1.msra.mxu0 0.0
    %1000 = vmatprep.subr.mxu0 0.0
    %1001 = vmatpush1.msra.mxu0 0.0
    %1002 = vmatprep.subr.mxu0 0.0
    %1003 = vmatpush1.msra.mxu0 0.0
    %1004 = vmatprep.subr.mxu0 0.0
    %1005 = vmatpush1.msra.mxu0 0.0
    %1006 = vmatprep.subr.mxu0 0.0
    %1007 = vmatpush1.msra.mxu0 0.0
    %1008 = vmatprep.subr.mxu0 0.0
    %1009 = vmatpush1.msra.mxu0 0.0
    %1010 = vmatprep.subr.mxu0 0.0
    %1011 = vmatpush1.msra.mxu0 0.0
    %1012 = vmatprep.subr.mxu0 0.0
    %1013 = vmatpush1.msra.mxu0 0.0
    %1014 = vmatprep.subr.mxu0 0.0
    %1015 = vmatpush1.msra.mxu0 0.0
    %1016 = vmatprep.subr.mxu0 0.0
    %1017 = vmatpush1.msra.mxu0 0.0
    %1018 = vmatprep.subr.mxu0 0.0
    %1019 = vmatpush1.msra.mxu0 0.0
    %1020 = vmatprep.subr.mxu0 0.0
    %1021 = vmatpush1.msra.mxu0 0.0
    %1022 = vmatprep.mubr.f32.mxu0 0.0
    %1023 = vmatmul.mubr.f32.gmra.mrb[0].mxu0 %v725
    %v1024 = vpop.f32.mrb[0].mxu0
    %v1025 = vadd.f32 %v954, %v1024
    %v1026 = vpop.f32.mrb[0].mxu0
    %v1027 = vadd.f32 %v956, %v1026
    %1028 = vdwg.mxu0
    %1029 = vmatprep.subr.mxu0 0.0
    %1030 = vmatpush1.msra.mxu0 %v728
    %1031 = vmatprep.subr.mxu0 0.0
    %1032 = vmatpush1.msra.mxu0 %v731
    %1033 = vmatprep.subr.mxu0 0.0
    %1034 = vmatpush1.msra.mxu0 %v734
    %1035 = vmatprep.subr.mxu0 0.0
    %1036 = vmatpush1.msra.mxu0 %v737
    %1037 = vmatprep.subr.mxu0 0.0
    %1038 = vmatpush1.msra.mxu0 %v740
    %1039 = vmatprep.subr.mxu0 0.0
    %1040 = vmatpush1.msra.mxu0 %v743
    %1041 = vmatprep.subr.mxu0 0.0
    %1042 = vmatpush1.msra.mxu0 %v746
    %1043 = vmatprep.subr.mxu0 0.0
    %1044 = vmatpush1.msra.mxu0 %v749
    %1045 = vmatprep.subr.mxu0 0.0
    %1046 = vmatpush1.msra.mxu0 %v752
    %1047 = vmatprep.subr.mxu0 0.0
    %1048 = vmatpush1.msra.mxu0 %v755
    %1049 = vmatprep.subr.mxu0 0.0
    %1050 = vmatpush1.msra.mxu0 %v758
    %1051 = vmatprep.subr.mxu0 0.0
    %1052 = vmatpush1.msra.mxu0 %v761
    %1053 = vmatprep.subr.mxu0 0.0
    %1054 = vmatpush1.msra.mxu0 %v764
    %1055 = vmatprep.subr.mxu0 0.0
    %1056 = vmatpush1.msra.mxu0 %v767
    %1057 = vmatprep.subr.mxu0 0.0
    %1058 = vmatpush1.msra.mxu0 %v770
    %1059 = vmatprep.subr.mxu0 0.0
    %1060 = vmatpush1.msra.mxu0 %v773
    %1061 = vmatprep.subr.mxu0 0.0
    %1062 = vmatpush1.msra.mxu0 %v776
    %1063 = vmatprep.subr.mxu0 0.0
    %1064 = vmatpush1.msra.mxu0 %v779
    %1065 = vmatprep.subr.mxu0 0.0
    %1066 = vmatpush1.msra.mxu0 %v782
    %1067 = vmatprep.subr.mxu0 0.0
    %1068 = vmatpush1.msra.mxu0 %v785
    %1069 = vmatprep.subr.mxu0 0.0
    %1070 = vmatpush1.msra.mxu0 %v788
    %1071 = vmatprep.subr.mxu0 0.0
    %1072 = vmatpush1.msra.mxu0 %v791
    %1073 = vmatprep.subr.mxu0 0.0
    %1074 = vmatpush1.msra.mxu0 %v794
    %1075 = vmatprep.subr.mxu0 0.0
    %1076 = vmatpush1.msra.mxu0 %v797
    %1077 = vmatprep.subr.mxu0 0.0
    %1078 = vmatpush1.msra.mxu0 %v800
    %1079 = vmatprep.subr.mxu0 0.0
    %1080 = vmatpush1.msra.mxu0 %v803
    %1081 = vmatprep.subr.mxu0 0.0
    %1082 = vmatpush1.msra.mxu0 %v806
    %1083 = vmatprep.subr.mxu0 0.0
    %1084 = vmatpush1.msra.mxu0 %v809
    %1085 = vmatprep.subr.mxu0 0.0
    %1086 = vmatpush1.msra.mxu0 %v812
    %1087 = vmatprep.subr.mxu0 0.0
    %1088 = vmatpush1.msra.mxu0 %v815
    %1089 = vmatprep.subr.mxu0 0.0
    %1090 = vmatpush1.msra.mxu0 %v818
    %1091 = vmatprep.subr.mxu0 0.0
    %1092 = vmatpush1.msra.mxu0 %v821
    %1093 = vmatprep.mubr.f32.mxu0 %v724
    %1094 = vmatmul.mubr.f32.gmra.mrb[0].mxu0 %v723
    %v1095 = vpop.f32.mrb[0].mxu0
    %v1096 = vadd.f32 %v883, %v1095
    %v1097 = vpop.f32.mrb[0].mxu0
    %1098 = vdwg.mxu0
    %1099 = vmatprep.subr.mxu0 0.0
    %1100 = vmatpush1.msra.mxu0 %v824
    %1101 = vmatprep.subr.mxu0 0.0
    %1102 = vmatpush1.msra.mxu0 %v827
    %1103 = vmatprep.subr.mxu0 0.0
    %1104 = vmatpush1.msra.mxu0 %v830
    %1105 = vmatprep.subr.mxu0 0.0
    %1106 = vmatpush1.msra.mxu0 %v833
    %1107 = vmatprep.subr.mxu0 0.0
    %1108 = vmatpush1.msra.mxu0 %v836
    %1109 = vmatprep.subr.mxu0 0.0
    %1110 = vmatpush1.msra.mxu0 %v839
    %1111 = vmatprep.subr.mxu0 0.0
    %1112 = vmatpush1.msra.mxu0 %v842
    %1113 = vmatprep.subr.mxu0 0.0
    %1114 = vmatpush1.msra.mxu0 %v845
    %1115 = vmatprep.subr.mxu0 0.0
    %1116 = vmatpush1.msra.mxu0 %v848
    %1117 = vmatprep.subr.mxu0 0.0
    %1118 = vmatpush1.msra.mxu0 %v851
    %1119 = vmatprep.subr.mxu0 0.0
    %1120 = vmatpush1.msra.mxu0 %v854
    %1121 = vmatprep.subr.mxu0 0.0
    %1122 = vmatpush1.msra.mxu0 %v857
    %1123 = vmatprep.subr.mxu0 0.0
    %1124 = vmatpush1.msra.mxu0 %v860
    %1125 = vmatprep.subr.mxu0 0.0
    %1126 = vmatpush1.msra.mxu0 %v863
    %1127 = vmatprep.subr.mxu0 0.0
    %1128 = vmatpush1.msra.mxu0 %v866
    %1129 = vmatprep.subr.mxu0 0.0
    %1130 = vmatpush1.msra.mxu0 %v869
    %1131 = vmatprep.subr.mxu0 0.0
    %1132 = vmatpush1.msra.mxu0 0.0
    %1133 = vmatprep.subr.mxu0 0.0
    %1134 = vmatpush1.msra.mxu0 0.0
    %1135 = vmatprep.subr.mxu0 0.0
    %1136 = vmatpush1.msra.mxu0 0.0
    %1137 = vmatprep.subr.mxu0 0.0
    %1138 = vmatpush1.msra.mxu0 0.0
    %1139 = vmatprep.subr.mxu0 0.0
    %1140 = vmatpush1.msra.mxu0 0.0
    %1141 = vmatprep.subr.mxu0 0.0
    %1142 = vmatpush1.msra.mxu0 0.0
    %1143 = vmatprep.subr.mxu0 0.0
    %1144 = vmatpush1.msra.mxu0 0.0
    %1145 = vmatprep.subr.mxu0 0.0
    %1146 = vmatpush1.msra.mxu0 0.0
    %1147 = vmatprep.subr.mxu0 0.0
    %1148 = vmatpush1.msra.mxu0 0.0
    %1149 = vmatprep.subr.mxu0 0.0
    %1150 = vmatpush1.msra.mxu0 0.0
    %1151 = vmatprep.subr.mxu0 0.0
    %1152 = vmatpush1.msra.mxu0 0.0
    %1153 = vmatprep.subr.mxu0 0.0
    %1154 = vmatpush1.msra.mxu0 0.0
    %1155 = vmatprep.subr.mxu0 0.0
    %1156 = vmatpush1.msra.mxu0 0.0
    %1157 = vmatprep.subr.mxu0 0.0
    %1158 = vmatpush1.msra.mxu0 0.0
    %1159 = vmatprep.subr.mxu0 0.0
    %1160 = vmatpush1.msra.mxu0 0.0
    %1161 = vmatprep.subr.mxu0 0.0
    %1162 = vmatpush1.msra.mxu0 0.0
    %1163 = vmatprep.mubr.f32.mxu0 0.0
    %1164 = vmatmul.mubr.f32.gmra.mrb[0].mxu0 %v725
    %v1165 = vpop.f32.mrb[0].mxu0
    %v1166 = vadd.f32 %v1096, %v1165
    %v1167 = vpop.f32.mrb[0].mxu0
    %1168 = vdwg.mxu0
    %v1169 = vmax.f32 %v1025, 0.0
    %v1170 = vmax.f32 %v1027, 0.0
    %v1171 = vmax.f32 %v1166, 0.0
    %v1172 = vld [vmem:[%s7] sm:$0xff]
    %v1173 = vld [vmem:[%s7 + $0x8] sm:$0xff]
    %v1174 = vld [vmem:[%s7 + $0x10] sm:$0xff]
    %v1175 = vld [vmem:[%s7 + $0x18] sm:$0xff]
    %v1176 = vld [vmem:[%s7 + $0x20] sm:$0xff]
    %v1177 = vld [vmem:[%s7 + $0x28] sm:$0xff]
    %v1178 = vld [vmem:[%s7 + $0x30] sm:$0xff]
    %v1179 = vld [vmem:[%s7 + $0x38] sm:$0xff]
    %v1180 = vld [vmem:[%s7 + $0x40] sm:$0xff]
    %v1181 = vld [vmem:[%s7 + $0x48] sm:$0xff]
    %v1182 = vld [vmem:[%s7 + $0x50] sm:$0xff]
    %v1183 = vld [vmem:[%s7 + $0x58] sm:$0xff]
    %v1184 = vld [vmem:[%s7 + $0x60] sm:$0xff]
    %v1185 = vld [vmem:[%s7 + $0x68] sm:$0xff]
    %v1186 = vld [vmem:[%s7 + $0x70] sm:$0xff]
    %v1187 = vld [vmem:[%s7 + $0x78] sm:$0xff]
    %v1188 = vld [vmem:[%s7 + $0x80] sm:$0xff]
    %v1189 = vld [vmem:[%s7 + $0x88] sm:$0xff]
    %v1190 = vld [vmem:[%s7 + $0x90] sm:$0xff]
    %v1191 = vld [vmem:[%s7 + $0x98] sm:$0xff]
    %v1192 = vld [vmem:[%s7 + $0xa0] sm:$0xff]
    %v1193 = vld [vmem:[%s7 + $0xa8] sm:$0xff]
    %v1194 = vld [vmem:[%s7 + $0xb0] sm:$0xff]
    %v1195 = vld [vmem:[%s7 + $0xb8] sm:$0xff]
    %v1196 = vld [vmem:[%s7 + $0xc0] sm:$0xff]
    %v1197 = vld [vmem:[%s7 + $0xc8] sm:$0xff]
    %v1198 = vld [vmem:[%s7 + $0xd0] sm:$0xff]
    %v1199 = vld [vmem:[%s7 + $0xd8] sm:$0xff]
    %v1200 = vld [vmem:[%s7 + $0xe0] sm:$0xff]
    %v1201 = vld [vmem:[%s7 + $0xe8] sm:$0xff]
    %v1202 = vld [vmem:[%s7 + $0xf0] sm:$0xff]
    %v1203 = vld [vmem:[%s7 + $0xf8] sm:$0xff]
    %v1204 = vld [vmem:[%s7 + $0x100] sm:$0xff]
    %v1205 = vld [vmem:[%s7 + $0x108] sm:$0xff]
    %v1206 = vld [vmem:[%s7 + $0x110] sm:$0xff]
    %v1207 = vld [vmem:[%s7 + $0x118] sm:$0xff]
    %v1208 = vld [vmem:[%s7 + $0x120] sm:$0xff]
    %v1209 = vld [vmem:[%s7 + $0x128] sm:$0xff]
    %v1210 = vld [vmem:[%s7 + $0x130] sm:$0xff]
    %v1211 = vld [vmem:[%s7 + $0x138] sm:$0xff]
    %v1212 = vld [vmem:[%s7 + $0x140] sm:$0xff]
    %v1213 = vld [vmem:[%s7 + $0x148] sm:$0xff]
    %v1214 = vld [vmem:[%s7 + $0x150] sm:$0xff]
    %v1215 = vld [vmem:[%s7 + $0x158] sm:$0xff]
    %v1216 = vld [vmem:[%s7 + $0x160] sm:$0xff]
    %v1217 = vld [vmem:[%s7 + $0x168] sm:$0xff]
    %v1218 = vld [vmem:[%s7 + $0x170] sm:$0xff]
    %v1219 = vld [vmem:[%s7 + $0x178] sm:$0xff]
    %v1220 = vld [vmem:[%s7 + $0x180] sm:$0xff]
    %v1221 = vld [vmem:[%s7 + $0x188] sm:$0xff]
    %v1222 = vld [vmem:[%s7 + $0x190] sm:$0xff]
    %v1223 = vld [vmem:[%s7 + $0x198] sm:$0xff]
    %v1224 = vld [vmem:[%s7 + $0x1a0] sm:$0xff]
    %v1225 = vld [vmem:[%s7 + $0x1a8] sm:$0xff]
    %v1226 = vld [vmem:[%s7 + $0x1b0] sm:$0xff]
    %v1227 = vld [vmem:[%s7 + $0x1b8] sm:$0xff]
    %v1228 = vld [vmem:[%s7 + $0x1c0] sm:$0xff]
    %v1229 = vld [vmem:[%s7 + $0x1c8] sm:$0xff]
    %v1230 = vld [vmem:[%s7 + $0x1d0] sm:$0xff]
    %v1231 = vld [vmem:[%s7 + $0x1d8] sm:$0xff]
    %v1232 = vld [vmem:[%s7 + $0x1e0] sm:$0xff]
    %v1233 = vld [vmem:[%s7 + $0x1e8] sm:$0xff]
    %v1234 = vld [vmem:[%s7 + $0x1f0] sm:$0xff]
    %v1235 = vld [vmem:[%s7 + $0x1f8] sm:$0xff]
    %v1236 = vld [vmem:[%s7 + $0x200] sm:$0xff]
    %v1237 = vld [vmem:[%s7 + $0x208] sm:$0xff]
    %v1238 = vld [vmem:[%s7 + $0x210] sm:$0xff]
    %v1239 = vld [vmem:[%s7 + $0x218] sm:$0xff]
    %v1240 = vld [vmem:[%s7 + $0x220] sm:$0xff]
    %v1241 = vld [vmem:[%s7 + $0x228] sm:$0xff]
    %v1242 = vld [vmem:[%s7 + $0x230] sm:$0xff]
    %v1243 = vld [vmem:[%s7 + $0x238] sm:$0xff]
    %v1244 = vld [vmem:[%s7 + $0x240] sm:$0xff]
    %v1245 = vld [vmem:[%s7 + $0x248] sm:$0xff]
    %v1246 = vld [vmem:[%s7 + $0x250] sm:$0xff]
    %v1247 = vld [vmem:[%s7 + $0x258] sm:$0xff]
    %v1248 = vld [vmem:[%s7 + $0x260] sm:$0xff]
    %v1249 = vld [vmem:[%s7 + $0x268] sm:$0xff]
    %v1250 = vld [vmem:[%s7 + $0x270] sm:$0xff]
    %v1251 = vld [vmem:[%s7 + $0x278] sm:$0xff]
    %v1252 = vld [vmem:[%s7 + $0x280] sm:$0xff]
    %v1253 = vld [vmem:[%s7 + $0x288] sm:$0xff]
    %v1254 = vld [vmem:[%s7 + $0x290] sm:$0xff]
    %v1255 = vld [vmem:[%s7 + $0x298] sm:$0xff]
    %v1256 = vld [vmem:[%s7 + $0x2a0] sm:$0xff]
    %v1257 = vld [vmem:[%s7 + $0x2a8] sm:$0xff]
    %v1258 = vld [vmem:[%s7 + $0x2b0] sm:$0xff]
    %v1259 = vld [vmem:[%s7 + $0x2b8] sm:$0xff]
    %v1260 = vld [vmem:[%s7 + $0x2c0] sm:$0xff]
    %v1261 = vld [vmem:[%s7 + $0x2c8] sm:$0xff]
    %v1262 = vld [vmem:[%s7 + $0x2d0] sm:$0xff]
    %v1263 = vld [vmem:[%s7 + $0x2d8] sm:$0xff]
    %v1264 = vld [vmem:[%s7 + $0x2e0] sm:$0xff]
    %v1265 = vld [vmem:[%s7 + $0x2e8] sm:$0xff]
    %v1266 = vld [vmem:[%s7 + $0x2f0] sm:$0xff]
    %v1267 = vld [vmem:[%s7 + $0x2f8] sm:$0xff]
    %v1268 = vld [vmem:[%s7 + $0x300] sm:$0xff]
    %v1269 = vld [vmem:[%s7 + $0x308] sm:$0xff]
    %v1270 = vld [vmem:[%s7 + $0x310] sm:$0xff]
    %v1271 = vld [vmem:[%s7 + $0x318] sm:$0xff]
    %v1272 = vld [vmem:[%s7 + $0x320] sm:$0xff]
    %v1273 = vld [vmem:[%s7 + $0x328] sm:$0xff]
    %v1274 = vld [vmem:[%s7 + $0x330] sm:$0xff]
    %v1275 = vld [vmem:[%s7 + $0x338] sm:$0xff]
    %v1276 = vld [vmem:[%s7 + $0x340] sm:$0xff]
    %v1277 = vld [vmem:[%s7 + $0x348] sm:$0xff]
    %v1278 = vld [vmem:[%s7 + $0x350] sm:$0xff]
    %v1279 = vld [vmem:[%s7 + $0x358] sm:$0xff]
    %v1280 = vld [vmem:[%s7 + $0x360] sm:$0xff]
    %v1281 = vld [vmem:[%s7 + $0x368] sm:$0xff]
    %v1282 = vld [vmem:[%s7 + $0x370] sm:$0xff]
    %v1283 = vld [vmem:[%s7 + $0x378] sm:$0xff]
    %v1284 = vld [vmem:[%s7 + $0x380] sm:$0xff]
    %v1285 = vld [vmem:[%s7 + $0x388] sm:$0xff]
    %v1286 = vld [vmem:[%s7 + $0x390] sm:$0xff]
    %v1287 = vld [vmem:[%s7 + $0x398] sm:$0xff]
    %v1288 = vld [vmem:[%s7 + $0x3a0] sm:$0xff]
    %v1289 = vld [vmem:[%s7 + $0x3a8] sm:$0xff]
    %v1290 = vld [vmem:[%s7 + $0x3b0] sm:$0xff]
    %v1291 = vld [vmem:[%s7 + $0x3b8] sm:$0xff]
    %v1292 = vld [vmem:[%s7 + $0x3c0] sm:$0xff]
    %v1293 = vld [vmem:[%s7 + $0x3c8] sm:$0xff]
    %v1294 = vld [vmem:[%s7 + $0x3d0] sm:$0xff]
    %v1295 = vld [vmem:[%s7 + $0x3d8] sm:$0xff]
    %v1296 = vld [vmem:[%s7 + $0x3e0] sm:$0xff]
    %v1297 = vld [vmem:[%s7 + $0x3e8] sm:$0xff]
    %v1298 = vld [vmem:[%s7 + $0x3f0] sm:$0xff]
    %v1299 = vld [vmem:[%s7 + $0x3f8] sm:$0xff]
    %v1300 = vld [vmem:[%s7 + $0x400] sm:$0xff]
    %v1301 = vld [vmem:[%s7 + $0x408] sm:$0xff]
    %v1302 = vld [vmem:[%s7 + $0x410] sm:$0xff]
    %v1303 = vld [vmem:[%s7 + $0x418] sm:$0xff]
    %v1304 = vld [vmem:[%s7 + $0x420] sm:$0xff]
    %v1305 = vld [vmem:[%s7 + $0x428] sm:$0xff]
    %v1306 = vld [vmem:[%s7 + $0x430] sm:$0xff]
    %v1307 = vld [vmem:[%s7 + $0x438] sm:$0xff]
    %v1308 = vld [vmem:[%s7 + $0x440] sm:$0xff]
    %v1309 = vld [vmem:[%s7 + $0x448] sm:$0xff]
    %v1310 = vld [vmem:[%s7 + $0x450] sm:$0xff]
    %v1311 = vld [vmem:[%s7 + $0x458] sm:$0xff]
    %v1312 = vld [vmem:[%s7 + $0x460] sm:$0xff]
    %v1313 = vld [vmem:[%s7 + $0x468] sm:$0xff]
    %v1314 = vld [vmem:[%s7 + $0x470] sm:$0xff]
    %v1315 = vld [vmem:[%s7 + $0x478] sm:$0xff]
    %v1316 = vld [vmem:[%s7 + $0x480] sm:$0xff]
    %v1317 = vld [vmem:[%s7 + $0x488] sm:$0xff]
    %v1318 = vld [vmem:[%s7 + $0x490] sm:$0xff]
    %v1319 = vld [vmem:[%s7 + $0x498] sm:$0xff]
    %v1320 = vld [vmem:[%s7 + $0x4a0] sm:$0xff]
    %v1321 = vld [vmem:[%s7 + $0x4a8] sm:$0xff]
    %v1322 = vld [vmem:[%s7 + $0x4b0] sm:$0xff]
    %v1323 = vld [vmem:[%s7 + $0x4b8] sm:$0xff]
    %v1324 = vld [vmem:[%s7 + $0x4c0] sm:$0xff]
    %v1325 = vld [vmem:[%s7 + $0x4c8] sm:$0xff]
    %v1326 = vld [vmem:[%s7 + $0x4d0] sm:$0xff]
    %v1327 = vld [vmem:[%s7 + $0x4d8] sm:$0xff]
    %v1328 = vld [vmem:[%s7 + $0x4e0] sm:$0xff]
    %v1329 = vld [vmem:[%s7 + $0x4e8] sm:$0xff]
    %v1330 = vld [vmem:[%s7 + $0x4f0] sm:$0xff]
    %v1331 = vld [vmem:[%s7 + $0x4f8] sm:$0xff]
    %v1332 = vld [vmem:[%s7 + $0x500] sm:$0xff]
    %v1333 = vld [vmem:[%s7 + $0x508] sm:$0xff]
    %v1334 = vld [vmem:[%s7 + $0x510] sm:$0xff]
    %v1335 = vld [vmem:[%s7 + $0x518] sm:$0xff]
    %v1336 = vld [vmem:[%s7 + $0x520] sm:$0xff]
    %v1337 = vld [vmem:[%s7 + $0x528] sm:$0xff]
    %v1338 = vld [vmem:[%s7 + $0x530] sm:$0xff]
    %v1339 = vld [vmem:[%s7 + $0x538] sm:$0xff]
    %v1340 = vld [vmem:[%s7 + $0x540] sm:$0xff]
    %v1341 = vld [vmem:[%s7 + $0x548] sm:$0xff]
    %v1342 = vld [vmem:[%s7 + $0x550] sm:$0xff]
    %v1343 = vld [vmem:[%s7 + $0x558] sm:$0xff]
    %v1344 = vld [vmem:[%s7 + $0x560] sm:$0xff]
    %v1345 = vld [vmem:[%s7 + $0x568] sm:$0xff]
    %v1346 = vld [vmem:[%s7 + $0x570] sm:$0xff]
    %v1347 = vld [vmem:[%s7 + $0x578] sm:$0xff]
    %v1348 = vld [vmem:[%s7 + $0x580] sm:$0xff]
    %v1349 = vld [vmem:[%s7 + $0x588] sm:$0xff]
    %v1350 = vld [vmem:[%s7 + $0x590] sm:$0xff]
    %v1351 = vld [vmem:[%s7 + $0x598] sm:$0xff]
    %v1352 = vld [vmem:[%s7 + $0x5a0] sm:$0xff]
    %v1353 = vld [vmem:[%s7 + $0x5a8] sm:$0xff]
    %v1354 = vld [vmem:[%s7 + $0x5b0] sm:$0xff]
    %v1355 = vld [vmem:[%s7 + $0x5b8] sm:$0xff]
    %v1356 = vld [vmem:[%s7 + $0x5c0] sm:$0xff]
    %v1357 = vld [vmem:[%s7 + $0x5c8] sm:$0xff]
    %v1358 = vld [vmem:[%s7 + $0x5d0] sm:$0xff]
    %v1359 = vld [vmem:[%s7 + $0x5d8] sm:$0xff]
    %v1360 = vld [vmem:[%s7 + $0x5e0] sm:$0xff]
    %v1361 = vld [vmem:[%s7 + $0x5e8] sm:$0xff]
    %v1362 = vld [vmem:[%s7 + $0x5f0] sm:$0xff]
    %v1363 = vld [vmem:[%s7 + $0x5f8] sm:$0xff]
    %v1364 = vld [vmem:[%s8] sm:$0xf]
    %v1366 = vlaneseq
    %v1367 = vshrl.u32 %v1366, 7
    %v1368 = vsub.s32 0, %v1367
    %v1369 = vrot.slane %v1364, %v1368
    %v1370 = vlaneseq
    %v1371 = vshrl.u32 %v1370, 7
    %v1372 = vsub.s32 1, %v1371
    %v1373 = vrot.slane %v1364, %v1372
    %v1374 = vlaneseq
    %v1375 = vshrl.u32 %v1374, 7
    %v1376 = vsub.s32 2, %v1375
    %v1377 = vrot.slane %v1364, %v1376
    %v1378 = vlaneseq
    %v1379 = vshrl.u32 %v1378, 7
    %v1380 = vsub.s32 3, %v1379
    %v1381 = vrot.slane %v1364, %v1380
    %1386 = vmatprep.subr.mxu0 %v1173
    %1387 = vmatpush1.msra.mxu0 %v1172
    %1388 = vmatprep.subr.mxu0 %v1177
    %1389 = vmatpush1.msra.mxu0 %v1176
    %1390 = vmatprep.subr.mxu0 %v1181
    %1391 = vmatpush1.msra.mxu0 %v1180
    %1392 = vmatprep.subr.mxu0 %v1185
    %1393 = vmatpush1.msra.mxu0 %v1184
    %1394 = vmatprep.subr.mxu0 %v1189
    %1395 = vmatpush1.msra.mxu0 %v1188
    %1396 = vmatprep.subr.mxu0 %v1193
    %1397 = vmatpush1.msra.mxu0 %v1192
    %1398 = vmatprep.subr.mxu0 %v1197
    %1399 = vmatpush1.msra.mxu0 %v1196
    %1400 = vmatprep.subr.mxu0 %v1201
    %1401 = vmatpush1.msra.mxu0 %v1200
    %1402 = vmatprep.subr.mxu0 %v1205
    %1403 = vmatpush1.msra.mxu0 %v1204
    %1404 = vmatprep.subr.mxu0 %v1209
    %1405 = vmatpush1.msra.mxu0 %v1208
    %1406 = vmatprep.subr.mxu0 %v1213
    %1407 = vmatpush1.msra.mxu0 %v1212
    %1408 = vmatprep.subr.mxu0 %v1217
    %1409 = vmatpush1.msra.mxu0 %v1216
    %1410 = vmatprep.subr.mxu0 %v1221
    %1411 = vmatpush1.msra.mxu0 %v1220
    %1412 = vmatprep.subr.mxu0 %v1225
    %1413 = vmatpush1.msra.mxu0 %v1224
    %1414 = vmatprep.subr.mxu0 %v1229
    %1415 = vmatpush1.msra.mxu0 %v1228
    %1416 = vmatprep.subr.mxu0 %v1233
    %1417 = vmatpush1.msra.mxu0 %v1232
    %1418 = vmatprep.subr.mxu0 %v1237
    %1419 = vmatpush1.msra.mxu0 %v1236
    %1420 = vmatprep.subr.mxu0 %v1241
    %1421 = vmatpush1.msra.mxu0 %v1240
    %1422 = vmatprep.subr.mxu0 %v1245
    %1423 = vmatpush1.msra.mxu0 %v1244
    %1424 = vmatprep.subr.mxu0 %v1249
    %1425 = vmatpush1.msra.mxu0 %v1248
    %1426 = vmatprep.subr.mxu0 %v1253
    %1427 = vmatpush1.msra.mxu0 %v1252
    %1428 = vmatprep.subr.mxu0 %v1257
    %1429 = vmatpush1.msra.mxu0 %v1256
    %1430 = vmatprep.subr.mxu0 %v1261
    %1431 = vmatpush1.msra.mxu0 %v1260
    %1432 = vmatprep.subr.mxu0 %v1265
    %1433 = vmatpush1.msra.mxu0 %v1264
    %1434 = vmatprep.subr.mxu0 %v1269
    %1435 = vmatpush1.msra.mxu0 %v1268
    %1436 = vmatprep.subr.mxu0 %v1273
    %1437 = vmatpush1.msra.mxu0 %v1272
    %1438 = vmatprep.subr.mxu0 %v1277
    %1439 = vmatpush1.msra.mxu0 %v1276
    %1440 = vmatprep.subr.mxu0 %v1281
    %1441 = vmatpush1.msra.mxu0 %v1280
    %1442 = vmatprep.subr.mxu0 %v1285
    %1443 = vmatpush1.msra.mxu0 %v1284
    %1444 = vmatprep.subr.mxu0 %v1289
    %1445 = vmatpush1.msra.mxu0 %v1288
    %1446 = vmatprep.subr.mxu0 %v1293
    %1447 = vmatpush1.msra.mxu0 %v1292
    %1448 = vmatprep.subr.mxu0 %v1297
    %1449 = vmatpush1.msra.mxu0 %v1296
    %1450 = vmatprep.mubr.f32.mxu0 %v1170
    %1451 = vmatmul.mubr.f32.gmra.mrb[0].mxu0 %v1169
    %v1452 = vpop.f32.mrb[0].mxu0
    %v1453 = vadd.f32 %v1369, %v1452
    %v1454 = vpop.f32.mrb[0].mxu0
    %v1455 = vadd.f32 %v1373, %v1454
    %1456 = vdwg.mxu0
    %1457 = vmatprep.subr.mxu0 %v1301
    %1458 = vmatpush1.msra.mxu0 %v1300
    %1459 = vmatprep.subr.mxu0 %v1305
    %1460 = vmatpush1.msra.mxu0 %v1304
    %1461 = vmatprep.subr.mxu0 %v1309
    %1462 = vmatpush1.msra.mxu0 %v1308
    %1463 = vmatprep.subr.mxu0 %v1313
    %1464 = vmatpush1.msra.mxu0 %v1312
    %1465 = vmatprep.subr.mxu0 %v1317
    %1466 = vmatpush1.msra.mxu0 %v1316
    %1467 = vmatprep.subr.mxu0 %v1321
    %1468 = vmatpush1.msra.mxu0 %v1320
    %1469 = vmatprep.subr.mxu0 %v1325
    %1470 = vmatpush1.msra.mxu0 %v1324
    %1471 = vmatprep.subr.mxu0 %v1329
    %1472 = vmatpush1.msra.mxu0 %v1328
    %1473 = vmatprep.subr.mxu0 %v1333
    %1474 = vmatpush1.msra.mxu0 %v1332
    %1475 = vmatprep.subr.mxu0 %v1337
    %1476 = vmatpush1.msra.mxu0 %v1336
    %1477 = vmatprep.subr.mxu0 %v1341
    %1478 = vmatpush1.msra.mxu0 %v1340
    %1479 = vmatprep.subr.mxu0 %v1345
    %1480 = vmatpush1.msra.mxu0 %v1344
    %1481 = vmatprep.subr.mxu0 %v1349
    %1482 = vmatpush1.msra.mxu0 %v1348
    %1483 = vmatprep.subr.mxu0 %v1353
    %1484 = vmatpush1.msra.mxu0 %v1352
    %1485 = vmatprep.subr.mxu0 %v1357
    %1486 = vmatpush1.msra.mxu0 %v1356
    %1487 = vmatprep.subr.mxu0 %v1361
    %1488 = vmatpush1.msra.mxu0 %v1360
    %1489 = vmatprep.subr.mxu0 0.0
    %1490 = vmatpush1.msra.mxu0 0.0
    %1491 = vmatprep.subr.mxu0 0.0
    %1492 = vmatpush1.msra.mxu0 0.0
    %1493 = vmatprep.subr.mxu0 0.0
    %1494 = vmatpush1.msra.mxu0 0.0
    %1495 = vmatprep.subr.mxu0 0.0
    %1496 = vmatpush1.msra.mxu0 0.0
    %1497 = vmatprep.subr.mxu0 0.0
    %1498 = vmatpush1.msra.mxu0 0.0
    %1499 = vmatprep.subr.mxu0 0.0
    %1500 = vmatpush1.msra.mxu0 0.0
    %1501 = vmatprep.subr.mxu0 0.0
    %1502 = vmatpush1.msra.mxu0 0.0
    %1503 = vmatprep.subr.mxu0 0.0
    %1504 = vmatpush1.msra.mxu0 0.0
    %1505 = vmatprep.subr.mxu0 0.0
    %1506 = vmatpush1.msra.mxu0 0.0
    %1507 = vmatprep.subr.mxu0 0.0
    %1508 = vmatpush1.msra.mxu0 0.0
    %1509 = vmatprep.subr.mxu0 0.0
    %1510 = vmatpush1.msra.mxu0 0.0
    %1511 = vmatprep.subr.mxu0 0.0
    %1512 = vmatpush1.msra.mxu0 0.0
    %1513 = vmatprep.subr.mxu0 0.0
    %1514 = vmatpush1.msra.mxu0 0.0
    %1515 = vmatprep.subr.mxu0 0.0
    %1516 = vmatpush1.msra.mxu0 0.0
    %1517 = vmatprep.subr.mxu0 0.0
    %1518 = vmatpush1.msra.mxu0 0.0
    %1519 = vmatprep.subr.mxu0 0.0
    %1520 = vmatpush1.msra.mxu0 0.0
    %1521 = vmatprep.mubr.f32.mxu0 0.0
    %1522 = vmatmul.mubr.f32.gmra.mrb[0].mxu0 %v1171
    %v1523 = vpop.f32.mrb[0].mxu0
    %v1524 = vadd.f32 %v1453, %v1523
    %v1525 = vpop.f32.mrb[0].mxu0
    %v1526 = vadd.f32 %v1455, %v1525
    %1527 = vdwg.mxu0
    %1528 = vmatprep.subr.mxu0 %v1175
    %1529 = vmatpush1.msra.mxu0 %v1174
    %1530 = vmatprep.subr.mxu0 %v1179
    %1531 = vmatpush1.msra.mxu0 %v1178
    %1532 = vmatprep.subr.mxu0 %v1183
    %1533 = vmatpush1.msra.mxu0 %v1182
    %1534 = vmatprep.subr.mxu0 %v1187
    %1535 = vmatpush1.msra.mxu0 %v1186
    %1536 = vmatprep.subr.mxu0 %v1191
    %1537 = vmatpush1.msra.mxu0 %v1190
    %1538 = vmatprep.subr.mxu0 %v1195
    %1539 = vmatpush1.msra.mxu0 %v1194
    %1540 = vmatprep.subr.mxu0 %v1199
    %1541 = vmatpush1.msra.mxu0 %v1198
    %1542 = vmatprep.subr.mxu0 %v1203
    %1543 = vmatpush1.msra.mxu0 %v1202
    %1544 = vmatprep.subr.mxu0 %v1207
    %1545 = vmatpush1.msra.mxu0 %v1206
    %1546 = vmatprep.subr.mxu0 %v1211
    %1547 = vmatpush1.msra.mxu0 %v1210
    %1548 = vmatprep.subr.mxu0 %v1215
    %1549 = vmatpush1.msra.mxu0 %v1214
    %1550 = vmatprep.subr.mxu0 %v1219
    %1551 = vmatpush1.msra.mxu0 %v1218
    %1552 = vmatprep.subr.mxu0 %v1223
    %1553 = vmatpush1.msra.mxu0 %v1222
    %1554 = vmatprep.subr.mxu0 %v1227
    %1555 = vmatpush1.msra.mxu0 %v1226
    %1556 = vmatprep.subr.mxu0 %v1231
    %1557 = vmatpush1.msra.mxu0 %v1230
    %1558 = vmatprep.subr.mxu0 %v1235
    %1559 = vmatpush1.msra.mxu0 %v1234
    %1560 = vmatprep.subr.mxu0 %v1239
    %1561 = vmatpush1.msra.mxu0 %v1238
    %1562 = vmatprep.subr.mxu0 %v1243
    %1563 = vmatpush1.msra.mxu0 %v1242
    %1564 = vmatprep.subr.mxu0 %v1247
    %1565 = vmatpush1.msra.mxu0 %v1246
    %1566 = vmatprep.subr.mxu0 %v1251
    %1567 = vmatpush1.msra.mxu0 %v1250
    %1568 = vmatprep.subr.mxu0 %v1255
    %1569 = vmatpush1.msra.mxu0 %v1254
    %1570 = vmatprep.subr.mxu0 %v1259
    %1571 = vmatpush1.msra.mxu0 %v1258
    %1572 = vmatprep.subr.mxu0 %v1263
    %1573 = vmatpush1.msra.mxu0 %v1262
    %1574 = vmatprep.subr.mxu0 %v1267
    %1575 = vmatpush1.msra.mxu0 %v1266
    %1576 = vmatprep.subr.mxu0 %v1271
    %1577 = vmatpush1.msra.mxu0 %v1270
    %1578 = vmatprep.subr.mxu0 %v1275
    %1579 = vmatpush1.msra.mxu0 %v1274
    %1580 = vmatprep.subr.mxu0 %v1279
    %1581 = vmatpush1.msra.mxu0 %v1278
    %1582 = vmatprep.subr.mxu0 %v1283
    %1583 = vmatpush1.msra.mxu0 %v1282
    %1584 = vmatprep.subr.mxu0 %v1287
    %1585 = vmatpush1.msra.mxu0 %v1286
    %1586 = vmatprep.subr.mxu0 %v1291
    %1587 = vmatpush1.msra.mxu0 %v1290
    %1588 = vmatprep.subr.mxu0 %v1295
    %1589 = vmatpush1.msra.mxu0 %v1294
    %1590 = vmatprep.subr.mxu0 %v1299
    %1591 = vmatpush1.msra.mxu0 %v1298
    %1592 = vmatprep.mubr.f32.mxu0 %v1170
    %1593 = vmatmul.mubr.f32.gmra.mrb[0].mxu0 %v1169
    %v1594 = vpop.f32.mrb[0].mxu0
    %v1595 = vadd.f32 %v1377, %v1594
    %v1596 = vpop.f32.mrb[0].mxu0
    %v1597 = vadd.f32 %v1381, %v1596
    %1598 = vdwg.mxu0
    %1599 = vmatprep.subr.mxu0 %v1303
    %1600 = vmatpush1.msra.mxu0 %v1302
    %1601 = vmatprep.subr.mxu0 %v1307
    %1602 = vmatpush1.msra.mxu0 %v1306
    %1603 = vmatprep.subr.mxu0 %v1311
    %1604 = vmatpush1.msra.mxu0 %v1310
    %1605 = vmatprep.subr.mxu0 %v1315
    %1606 = vmatpush1.msra.mxu0 %v1314
    %1607 = vmatprep.subr.mxu0 %v1319
    %1608 = vmatpush1.msra.mxu0 %v1318
    %1609 = vmatprep.subr.mxu0 %v1323
    %1610 = vmatpush1.msra.mxu0 %v1322
    %1611 = vmatprep.subr.mxu0 %v1327
    %1612 = vmatpush1.msra.mxu0 %v1326
    %1613 = vmatprep.subr.mxu0 %v1331
    %1614 = vmatpush1.msra.mxu0 %v1330
    %1615 = vmatprep.subr.mxu0 %v1335
    %1616 = vmatpush1.msra.mxu0 %v1334
    %1617 = vmatprep.subr.mxu0 %v1339
    %1618 = vmatpush1.msra.mxu0 %v1338
    %1619 = vmatprep.subr.mxu0 %v1343
    %1620 = vmatpush1.msra.mxu0 %v1342
    %1621 = vmatprep.subr.mxu0 %v1347
    %1622 = vmatpush1.msra.mxu0 %v1346
    %1623 = vmatprep.subr.mxu0 %v1351
    %1624 = vmatpush1.msra.mxu0 %v1350
    %1625 = vmatprep.subr.mxu0 %v1355
    %1626 = vmatpush1.msra.mxu0 %v1354
    %1627 = vmatprep.subr.mxu0 %v1359
    %1628 = vmatpush1.msra.mxu0 %v1358
    %1629 = vmatprep.subr.mxu0 %v1363
    %1630 = vmatpush1.msra.mxu0 %v1362
    %1631 = vmatprep.subr.mxu0 0.0
    %1632 = vmatpush1.msra.mxu0 0.0
    %1633 = vmatprep.subr.mxu0 0.0
    %1634 = vmatpush1.msra.mxu0 0.0
    %1635 = vmatprep.subr.mxu0 0.0
    %1636 = vmatpush1.msra.mxu0 0.0
    %1637 = vmatprep.subr.mxu0 0.0
    %1638 = vmatpush1.msra.mxu0 0.0
    %1639 = vmatprep.subr.mxu0 0.0
    %1640 = vmatpush1.msra.mxu0 0.0
    %1641 = vmatprep.subr.mxu0 0.0
    %1642 = vmatpush1.msra.mxu0 0.0
    %1643 = vmatprep.subr.mxu0 0.0
    %1644 = vmatpush1.msra.mxu0 0.0
    %1645 = vmatprep.subr.mxu0 0.0
    %1646 = vmatpush1.msra.mxu0 0.0
    %1647 = vmatprep.subr.mxu0 0.0
    %1648 = vmatpush1.msra.mxu0 0.0
    %1649 = vmatprep.subr.mxu0 0.0
    %1650 = vmatpush1.msra.mxu0 0.0
    %1651 = vmatprep.subr.mxu0 0.0
    %1652 = vmatpush1.msra.mxu0 0.0
    %1653 = vmatprep.subr.mxu0 0.0
    %1654 = vmatpush1.msra.mxu0 0.0
    %1655 = vmatprep.subr.mxu0 0.0
    %1656 = vmatpush1.msra.mxu0 0.0
    %1657 = vmatprep.subr.mxu0 0.0
    %1658 = vmatpush1.msra.mxu0 0.0
    %1659 = vmatprep.subr.mxu0 0.0
    %1660 = vmatpush1.msra.mxu0 0.0
    %1661 = vmatprep.subr.mxu0 0.0
    %1662 = vmatpush1.msra.mxu0 0.0
    %1663 = vmatprep.mubr.f32.mxu0 0.0
    %1664 = vmatmul.mubr.f32.gmra.mrb[0].mxu0 %v1171
    %v1665 = vpop.f32.mrb[0].mxu0
    %v1666 = vadd.f32 %v1595, %v1665
    %v1667 = vpop.f32.mrb[0].mxu0
    %v1668 = vadd.f32 %v1597, %v1667
    %1669 = vdwg.mxu0
    %v1670 = vmax.f32 %v1524, 0.0
    %v1671 = vmax.f32 %v1526, 0.0
    %v1672 = vmax.f32 %v1666, 0.0
    %v1673 = vmax.f32 %v1668, 0.0
    %v1678 = vcombine.low %v1670, %v1671
    %v1679 = vcombine.low %v1672, %v1673
    %v1681 = vunpack.c.l.s4 1983009808
    %v1682 = vunpack.c.0.s8 %v1681
    %v1683 = vlaneseq
    %v1684 = vshrl.u32 %v1683, 7
    %v1685 = vsub.s32 %v1682, %v1684
    %v1686 = vrot.slane %v1678, %v1685
    %v1688 = vunpack.c.l.s4 1983009808
    %v1689 = vunpack.c.0.s8 %v1688
    %v1690 = vlaneseq
    %v1691 = vshrl.u32 %v1690, 7
    %v1692 = vsub.s32 %v1689, %v1691
    %v1693 = vrot.slane %v1679, %v1692
    %v1694 = vcombine.low %v1686, %v1693
    %vm1696 = vcmask 1041408
    %vm1697 = vcmask 1043458
    %vm1698 = vmor %vm1697, %vm1696
    %vm1699 = vcmask 1045508
    %vm1700 = vmor %vm1699, %vm1698
    %vm1701 = vcmask 785414
    %vm1702 = vmor %vm1701, %vm1700
    %1703 = vst.msk [vmem:[#allocation2] sm:$0xff] %vm1702, %v1694
    // Predicated region
    $region38: #{tpu_custom_call.1} parent=1 // pred_check
      _
    $region39: #{tpu_custom_call.1} parent=1 // pred_check_branch
      %1705 = sbr.rel (0) target = $region41
    $region40: #{tpu_custom_call.1} parent=1 // pred_region
      %s1707 = ssub.s32 128, 128
      %1708 = vsyncadd [#allocation3], %s1707
      %s1710 = sshll.u32 [#allocation2], 4
      %s1711 = int_to_ptr.vmem [resolvable:$true] %s1710
      %1713 = dma.vmem_to_hbm [thread:$0]  %s1711, 128, %s9, [#allocation3]
    $region41: #{tpu_custom_call.1} parent=1 // pred_fallthru
      _
    // Predicated region
    $region42: #{tpu_custom_call.1} parent=1 // pred_check
      _
    $region43: #{tpu_custom_call.1} parent=1 // pred_check_branch
      %1715 = sbr.rel (0) target = $region45
    $region44: #{tpu_custom_call.1} parent=1 // pred_region
      %1716 = dma.done [#allocation3], 128
    $region45: #{tpu_custom_call.1} parent=1 // pred_fallthru
      _
    %1717 = vsyncpa [#allocation3], 1

</llo_original>
